<compile_context>
chip_gen: v6e
topology: v6e:2x2x1
jax: 0.10.0
libtpu: 0.0.40
codegen_flags: <defaults>
</compile_context>

<pallas_src>
import functools

import jax
import jax.numpy as jnp
from jax.experimental import pallas as pl
from jax.experimental.pallas import tpu as pltpu


_ACTIVATIONS = {
    "ReLU": lambda x: jnp.maximum(x, 0.0),
    "GELU": jax.nn.gelu,
    "Tanh": jnp.tanh,
    "SiLU": jax.nn.silu,
}


def _conv_stack_kernel(x_ref, w_ref, p_ref, o_ref, pad_ref, *,
                       T, D, K, pad, L, bb, mm_dtype, act_fn):
    """Fused ConvStack for one block of `bb` batch elements.

    x_ref:   (bb, T, D)          activations (channels on the 128-lane axis)
    w_ref:   (L, K*D, D)         conv weights; row = k*D + d_in, col = d_out (mm_dtype)
    p_ref:   (L, 3, D)           per-layer (conv bias, LN gamma, LN beta), f32
    o_ref:   (bb, T, D)          output
    pad_ref: (bb, T+2*pad, D)    VMEM scratch holding the zero-padded activation (mm_dtype)
    """
    # Zero the halo rows once; per-layer stores only touch rows [pad, pad+T).
    if pad > 0:
        zhalo = jnp.zeros((bb, pad, D), mm_dtype)
        pad_ref[:, 0:pad, :] = zhalo
        pad_ref[:, pad + T:pad + T + pad, :] = zhalo

    def layer(x, w_l, p_l):
        # activation; Dropout(p=0.1) is eval-mode identity.
        a = act_fn(x).astype(mm_dtype)
        # single store into the padded scratch (already in matmul dtype) — replaces the
        # old zero-pad concat + K-tap concat slab construction.
        pad_ref[:, pad:pad + T, :] = a

        # "same" Conv1d as K accumulated MXU dots against shifted slices of the scratch.
        y = None
        for k in range(K):
            tap = pad_ref[:, k:k + T, :].reshape(bb * T, D)
            wk = w_l[k * D:(k + 1) * D, :]
            part = jnp.dot(tap, wk, preferred_element_type=jnp.float32)
            y = part if y is None else y + part
        y = y + p_l[0:1, :]                                   # conv bias (f32)

        # LayerNorm over channels: single-pass stats, f32 math, PyTorch eps=1e-5.
        mean = jnp.mean(y, axis=-1, keepdims=True)
        msq = jnp.mean(y * y, axis=-1, keepdims=True)
        var = jnp.maximum(msq - mean * mean, 0.0)
        y = (y - mean) * jax.lax.rsqrt(var + 1e-5)
        y = y * p_l[1:2, :] + p_l[2:3, :]
        return y.reshape(bb, T, D)                            # stays in VMEM / vregs

    x = x_ref[...].astype(jnp.float32)
    if L <= 4:
        for l in range(L):                                    # full unroll for small stacks
            x = layer(x, w_ref[l].astype(mm_dtype), p_ref[l].astype(jnp.float32))
    else:
        # bound live ranges for deep stacks: dynamic per-layer indexing
        def body(l, xc):
            return layer(xc, w_ref[l].astype(mm_dtype), p_ref[l].astype(jnp.float32))
        x = jax.lax.fori_loop(0, L, body, x)

    o_ref[...] = x.astype(o_ref.dtype)


def _pick_batch_block(B, T, D, K, pad, L, in_bytes, mm_bytes, out_bytes,
                      vmem_budget=40 * 1024 * 1024):
    """Pick the batch block size.

    Targets >= 512 matmul rows per grid step (tile sweeps: ~85% of roofline at 512 vs
    ~63% at 256), keeps the parallel grid axis >= 2 so both v7x TensorCores get work,
    and shrinks to fit a conservative VMEM budget (safe on v7x's 64 MiB).
    """
    target_rows = 512
    bb = min(B, max(1, -(-target_rows // T)))
    if B >= 2:
        bb = min(bb, B // 2)          # grid >= 2 -> both v7x cores busy
    bb = max(bb, 1)

    def vmem_need(bb_):
        act_in = 2 * bb_ * T * D * in_bytes          # double-buffered input block
        act_out = 2 * bb_ * T * D * out_bytes        # double-buffered output block
        padbuf = bb_ * (T + 2 * pad) * D * mm_bytes  # conv scratch
        transient = 4 * bb_ * T * D * 4              # f32 temporaries (y, LN terms)
        consts = L * K * D * D * mm_bytes + L * 3 * D * 4
        return act_in + act_out + padbuf + transient + consts

    while bb > 1 and vmem_need(bb) > vmem_budget:
        bb -= 1
    while B % bb:
        bb -= 1
    return bb, vmem_need(bb)


def stack_conv_params(params):
    """params: list of (weight (D,D,K) PyTorch layout, bias (D,), gamma (D,), beta (D,)).

    Returns (L, K*D, D) weights and (L, 3, D) bias/gamma/beta stacks (f32; the wrapper
    casts weights to the matmul dtype).
    """
    ws, ps = [], []
    for (w, b, g, bt) in params:
        d_out, d_in, k = w.shape
        # w[c_out, c_in, k] -> W2[k*D + c_in, c_out]
        w2 = jnp.transpose(w, (2, 1, 0)).reshape(k * d_in, d_out)
        ws.append(w2.astype(jnp.float32))
        ps.append(jnp.stack([b, g, bt], axis=0).astype(jnp.float32))
    return jnp.stack(ws, axis=0), jnp.stack(ps, axis=0)


def conv_stack_pallas_btd(x_btd, stacked_w, stacked_p, kernel_size, *,
                          activation="ReLU", use_bf16_matmul=True,
                          out_dtype=jnp.float32):
    """Fused ConvStack on (B, T, D) activations (channels on lanes)."""
    B, T, D = x_btd.shape
    L = stacked_w.shape[0]
    K = kernel_size
    assert K % 2 == 1, "only odd kernel_size matches PyTorch Conv1d 'same' padding"
    pad = (K - 1) // 2
    act_fn = _ACTIVATIONS[activation]

    mm_dtype = jnp.bfloat16 if use_bf16_matmul else jnp.float32
    mm_bytes = 2 if use_bf16_matmul else 4
    out_bytes = jnp.dtype(out_dtype).itemsize

    if use_bf16_matmul:
        stacked_w = stacked_w.astype(jnp.bfloat16)    # halve weight DMA bytes
        x_btd = x_btd.astype(jnp.bfloat16)            # halve activation DMA bytes
    in_bytes = jnp.dtype(x_btd.dtype).itemsize

    bb, vmem_need = _pick_batch_block(B, T, D, K, pad, L, in_bytes, mm_bytes, out_bytes)
    vmem_limit = int(min(64 * 1024 * 1024, max(32 * 1024 * 1024, 2 * vmem_need)))

    kernel = functools.partial(
        _conv_stack_kernel, T=T, D=D, K=K, pad=pad, L=L, bb=bb,
        mm_dtype=mm_dtype, act_fn=act_fn)

    cost = pl.CostEstimate(
        flops=int(2 * B * T * D * D * K * L + 10 * B * T * D * L),
        transcendentals=int(B * T * L),
        bytes_accessed=int(B * T * D * (in_bytes + out_bytes)
                           + L * K * D * D * mm_bytes + L * 3 * D * 4),
    )

    def build(single_buffer_consts):
        const_kw = {}
        if single_buffer_consts and hasattr(pl, "Buffered"):
            # Weight/param blocks are grid-invariant: single-buffer them so the pipeline
            # does not hold two copies of the resident stacks in VMEM.
            const_kw = dict(pipeline_mode=pl.Buffered(1))
        return pl.pallas_call(
            kernel,
            out_shape=jax.ShapeDtypeStruct((B, T, D), out_dtype),
            grid_spec=pltpu.PrefetchScalarGridSpec(
                num_scalar_prefetch=0,
                grid=(B // bb,),
                in_specs=[
                    pl.BlockSpec((bb, T, D), lambda i: (i, 0, 0)),            # activations
                    pl.BlockSpec((L, K * D, D), lambda i: (0, 0, 0), **const_kw),  # weights
                    pl.BlockSpec((L, 3, D), lambda i: (0, 0, 0), **const_kw),      # b/g/beta
                ],
                out_specs=pl.BlockSpec((bb, T, D), lambda i: (i, 0, 0)),
                scratch_shapes=[pltpu.VMEM((bb, T + 2 * pad, D), mm_dtype)],
            ),
            compiler_params=pltpu.CompilerParams(
                dimension_semantics=("parallel",),
                vmem_limit_bytes=vmem_limit),
            cost_estimate=cost,
        )

    try:
        return build(True)(x_btd, stacked_w, stacked_p)
    except Exception:
        # pipeline_mode=pl.Buffered(1) unsupported on this jax build: fall back to default
        # double-buffered specs (correctness identical).
        return build(False)(x_btd, stacked_w, stacked_p)


def conv_stack_forward(x_bdt, params, kernel_size, *, activation="ReLU",
                       use_bf16_matmul=True):
    """PyTorch-layout entry point: x_bdt is (B, C, T), returns (B, C, T).

    NOTE: in a real model keep activations in (B, T, D) end-to-end and call
    conv_stack_pallas_btd directly; the transposes here only match the PyTorch interface.
    """
    x_btd = jnp.transpose(x_bdt, (0, 2, 1)).astype(jnp.float32)
    stacked_w, stacked_p = stack_conv_params(params)
    out_btd = conv_stack_pallas_btd(
        x_btd, stacked_w, stacked_p, kernel_size,
        activation=activation, use_bf16_matmul=use_bf16_matmul)
    return jnp.transpose(out_btd, (0, 2, 1))


def init_conv_stack_params(key, hidden_sizes, kernel_size):
    """Deterministic parameter init matching PyTorch module shapes."""
    params = []
    for i, h in enumerate(hidden_sizes):
        kw, kb = jax.random.split(jax.random.fold_in(key, i))
        fan_in = h * kernel_size
        bound = 1.0 / jnp.sqrt(fan_in)
        weight = jax.random.uniform(
            kw, (h, h, kernel_size), jnp.float32, -bound, bound)  # (D_out, D_in, K)
        bias = jax.random.uniform(kb, (h,), jnp.float32, -bound, bound)
        gamma = jnp.ones((h,), jnp.float32)   # nn.LayerNorm defaults
        beta = jnp.zeros((h,), jnp.float32)
        params.append((weight, bias, gamma, beta))
    return params


def _ref_conv_stack(x_bdt, params, kernel_size):
    """Pure-JAX reference (same semantics as the PyTorch module, eval mode, ReLU)."""
    pad = (kernel_size - 1) // 2
    x = x_bdt.astype(jnp.float32)                     # (B, D, T)
    for (w, b, g, bt) in params:
        a = jnp.maximum(x, 0.0)
        y = jax.lax.conv_general_dilated(
            a, w.astype(jnp.float32), window_strides=(1,), padding=[(pad, pad)],
            dimension_numbers=('NCH', 'OIH', 'NCH'))  # (B, D, T)
        y = y + b[None, :, None]
        y = jnp.transpose(y, (0, 2, 1))               # (B, T, D)
        mean = jnp.mean(y, axis=-1, keepdims=True)
        var = jnp.mean(jnp.square(y - mean), axis=-1, keepdims=True)
        y = (y - mean) / jnp.sqrt(var + 1e-5)
        y = y * g[None, None, :] + bt[None, None, :]
        x = jnp.transpose(y, (0, 2, 1))               # (B, D, T)
    return x


if __name__ == "__main__":
    # small shapes: batch=2, hidden (channels)=32, seq length T=16
    B, D, T = 2, 32, 16
    kernel_size = 3
    hidden_sizes = [D, D]       # blocks share hidden_size (in == out channels)
    activation = "ReLU"

    key = jax.random.PRNGKey(0)
    kx, kp = jax.random.split(key)
    x = jax.random.normal(kx, (B, D, T), jnp.float32)   # PyTorch layout (B, C, T)

    params = init_conv_stack_params(kp, hidden_sizes, kernel_size)
    ref = _ref_conv_stack(x, params, kernel_size)

    # default (bf16 MXU) path
    out = conv_stack_forward(x, params, kernel_size, activation=activation)
    out = jax.block_until_ready(out)
    assert out.shape == (B, D, T)
    max_err = float(jnp.max(jnp.abs(out - ref)))
    assert jnp.allclose(out, ref, atol=5e-2, rtol=5e-2), f"bf16 path max abs err {max_err}"

    # f32 matmul path (TPU f32 matmul is itself bf16-decomposed -> same loose tolerance)
    out32 = conv_stack_forward(x, params, kernel_size, activation=activation,
                               use_bf16_matmul=False)
    out32 = jax.block_until_ready(out32)
    max_err32 = float(jnp.max(jnp.abs(out32 - ref)))
    assert jnp.allclose(out32, ref, atol=5e-2, rtol=5e-2), f"f32 path max abs err {max_err32}"

    print("KERNEL_OK")
</pallas_src>

<mosaic_0001>
module attributes {stable_mosaic.version = 11 : i64} {
  func.func @_conv_stack_kernel(%arg0: i32, %arg1: memref<1x16x32xbf16, #tpu.memory_space<vmem>>, %arg2: memref<2x96x32xbf16, #tpu.memory_space<vmem>>, %arg3: memref<2x3x32xf32, #tpu.memory_space<vmem>>, %arg4: memref<1x16x32xf32, #tpu.memory_space<vmem>>, %arg5: memref<1x18x32xbf16, #tpu.memory_space<vmem>>) attributes {dimension_semantics = [#tpu.dimension_semantics<parallel>], iteration_bounds = array<i64: 2>, scalar_prefetch = 0 : i64, scratch_operands = 1 : i64, tpu.core_type = #tpu.core_type<tc>, window_params = [{transform_indices = @transform_0, window_bounds = array<i64: 1, 16, 32>}, {pipeline_mode = #tpu.pipeline_mode<synchronous>, transform_indices = @transform_1, window_bounds = array<i64: 2, 96, 32>}, {pipeline_mode = #tpu.pipeline_mode<synchronous>, transform_indices = @transform_2, window_bounds = array<i64: 2, 3, 32>}, {transform_indices = @transform_3, window_bounds = array<i64: 1, 16, 32>}]} {
    %cst = arith.constant 0.000000e+00 : bf16
    %0 = vector.broadcast %cst : bf16 to vector<1x1x32xbf16>
    %c0 = arith.constant 0 : index
    %c0_0 = arith.constant 0 : index
    %c0_1 = arith.constant 0 : index
    %1 = vector.load %arg5[%c0, %c0_0, %c0_1] : memref<1x18x32xbf16, #tpu.memory_space<vmem>>, vector<1x1x32xbf16>
    tpu.vector_store %arg5[%c0, %c0_0, %c0_1], %0 {strides = array<i32>} : memref<1x18x32xbf16, #tpu.memory_space<vmem>>, vector<1x1x32xbf16>,
    %c0_2 = arith.constant 0 : index
    %c17 = arith.constant 17 : index
    %c0_3 = arith.constant 0 : index
    %2 = vector.load %arg5[%c0_2, %c17, %c0_3] : memref<1x18x32xbf16, #tpu.memory_space<vmem>>, vector<1x1x32xbf16>
    tpu.vector_store %arg5[%c0_2, %c17, %c0_3], %0 {strides = array<i32>} : memref<1x18x32xbf16, #tpu.memory_space<vmem>>, vector<1x1x32xbf16>,
    %c0_4 = arith.constant 0 : index
    %c0_5 = arith.constant 0 : index
    %c0_6 = arith.constant 0 : index
    %3 = vector.load %arg1[%c0_4, %c0_5, %c0_6] : memref<1x16x32xbf16, #tpu.memory_space<vmem>>, vector<1x16x32xbf16>
    %4 = arith.extf %3 : vector<1x16x32xbf16> to vector<1x16x32xf32>
    %c0_7 = arith.constant 0 : index
    %c0_8 = arith.constant 0 : index
    %c0_9 = arith.constant 0 : index
    %5 = vector.load %arg2[%c0_7, %c0_8, %c0_9] : memref<2x96x32xbf16, #tpu.memory_space<vmem>>, vector<1x96x32xbf16>
    %6 = vector.shape_cast %5 : vector<1x96x32xbf16> to vector<96x32xbf16>
    %c0_10 = arith.constant 0 : index
    %c0_11 = arith.constant 0 : index
    %c0_12 = arith.constant 0 : index
    %7 = vector.load %arg3[%c0_10, %c0_11, %c0_12] : memref<2x3x32xf32, #tpu.memory_space<vmem>>, vector<1x3x32xf32>
    %8 = vector.shape_cast %7 : vector<1x3x32xf32> to vector<3x32xf32>
    %cst_13 = arith.constant 0.000000e+00 : f32
    %9 = vector.broadcast %cst_13 : f32 to vector<1x16x32xf32>
    %10 = arith.maximumf %4, %9 : vector<1x16x32xf32>
    %11 = arith.truncf %10 : vector<1x16x32xf32> to vector<1x16x32xbf16>
    %c0_14 = arith.constant 0 : index
    %c1 = arith.constant 1 : index
    %c0_15 = arith.constant 0 : index
    %12 = vector.load %arg5[%c0_14, %c1, %c0_15] : memref<1x18x32xbf16, #tpu.memory_space<vmem>>, vector<1x16x32xbf16>
    tpu.vector_store %arg5[%c0_14, %c1, %c0_15], %11 {strides = array<i32>} : memref<1x18x32xbf16, #tpu.memory_space<vmem>>, vector<1x16x32xbf16>,
    %c0_16 = arith.constant 0 : index
    %c0_17 = arith.constant 0 : index
    %c0_18 = arith.constant 0 : index
    %13 = vector.load %arg5[%c0_16, %c0_17, %c0_18] : memref<1x18x32xbf16, #tpu.memory_space<vmem>>, vector<1x16x32xbf16>
    %14 = vector.shape_cast %13 : vector<1x16x32xbf16> to vector<16x32xbf16>
    %15 = vector.extract_strided_slice %6 {offsets = [0, 0], sizes = [32, 32], strides = [1, 1]} : vector<96x32xbf16> to vector<32x32xbf16>
    %cst_19 = arith.constant dense<0.000000e+00> : vector<16x32xf32>
    %16 = tpu.matmul %14, %15, %cst_19 {dimension_numbers = #tpu.dot_dimension_numbers<[1], [0], [0], [1], [0, 0, 1, 1], [], []>} : vector<16x32xbf16>, vector<32x32xbf16>, vector<16x32xf32> -> vector<16x32xf32>
    %c0_20 = arith.constant 0 : index
    %c1_21 = arith.constant 1 : index
    %c0_22 = arith.constant 0 : index
    %17 = vector.load %arg5[%c0_20, %c1_21, %c0_22] : memref<1x18x32xbf16, #tpu.memory_space<vmem>>, vector<1x16x32xbf16>
    %18 = vector.shape_cast %17 : vector<1x16x32xbf16> to vector<16x32xbf16>
    %19 = vector.extract_strided_slice %6 {offsets = [32, 0], sizes = [32, 32], strides = [1, 1]} : vector<96x32xbf16> to vector<32x32xbf16>
    %cst_23 = arith.constant dense<0.000000e+00> : vector<16x32xf32>
    %20 = tpu.matmul %18, %19, %cst_23 {dimension_numbers = #tpu.dot_dimension_numbers<[1], [0], [0], [1], [0, 0, 1, 1], [], []>} : vector<16x32xbf16>, vector<32x32xbf16>, vector<16x32xf32> -> vector<16x32xf32>
    %21 = arith.addf %16, %20 : vector<16x32xf32>
    %c0_24 = arith.constant 0 : index
    %c2 = arith.constant 2 : index
    %c0_25 = arith.constant 0 : index
    %22 = vector.load %arg5[%c0_24, %c2, %c0_25] : memref<1x18x32xbf16, #tpu.memory_space<vmem>>, vector<1x16x32xbf16>
    %23 = vector.shape_cast %22 : vector<1x16x32xbf16> to vector<16x32xbf16>
    %24 = vector.extract_strided_slice %6 {offsets = [64, 0], sizes = [32, 32], strides = [1, 1]} : vector<96x32xbf16> to vector<32x32xbf16>
    %cst_26 = arith.constant dense<0.000000e+00> : vector<16x32xf32>
    %25 = tpu.matmul %23, %24, %cst_26 {dimension_numbers = #tpu.dot_dimension_numbers<[1], [0], [0], [1], [0, 0, 1, 1], [], []>} : vector<16x32xbf16>, vector<32x32xbf16>, vector<16x32xf32> -> vector<16x32xf32>
    %26 = arith.addf %21, %25 : vector<16x32xf32>
    %27 = vector.extract_strided_slice %8 {offsets = [0, 0], sizes = [1, 32], strides = [1, 1]} : vector<3x32xf32> to vector<1x32xf32>
    %28 = vector.broadcast %27 : vector<1x32xf32> to vector<16x32xf32>
    %29 = arith.addf %26, %28 : vector<16x32xf32>
    %cst_27 = arith.constant dense<0.000000e+00> : vector<16xf32>
    %30 = vector.multi_reduction <add>, %29, %cst_27 [1] : vector<16x32xf32> to vector<16xf32>
    %31 = vector.shape_cast %30 : vector<16xf32> to vector<16x1xf32>
    %cst_28 = arith.constant 3.200000e+01 : f32
    %32 = vector.broadcast %cst_28 : f32 to vector<16x1xf32>
    %33 = arith.divf %31, %32 : vector<16x1xf32>
    %34 = arith.mulf %29, %29 : vector<16x32xf32>
    %cst_29 = arith.constant dense<0.000000e+00> : vector<16xf32>
    %35 = vector.multi_reduction <add>, %34, %cst_29 [1] : vector<16x32xf32> to vector<16xf32>
    %36 = vector.shape_cast %35 : vector<16xf32> to vector<16x1xf32>
    %cst_30 = arith.constant 3.200000e+01 : f32
    %37 = vector.broadcast %cst_30 : f32 to vector<16x1xf32>
    %38 = arith.divf %36, %37 : vector<16x1xf32>
    %39 = arith.mulf %33, %33 : vector<16x1xf32>
    %40 = arith.subf %38, %39 : vector<16x1xf32>
    %cst_31 = arith.constant 0.000000e+00 : f32
    %41 = vector.broadcast %cst_31 : f32 to vector<16x1xf32>
    %42 = arith.maximumf %40, %41 : vector<16x1xf32>
    %43 = vector.broadcast %33 : vector<16x1xf32> to vector<16x32xf32>
    %44 = arith.subf %29, %43 : vector<16x32xf32>
    %cst_32 = arith.constant 9.99999974E-6 : f32
    %45 = vector.broadcast %cst_32 : f32 to vector<16x1xf32>
    %46 = arith.addf %42, %45 : vector<16x1xf32>
    %47 = math.rsqrt %46 : vector<16x1xf32>
    %48 = vector.broadcast %47 : vector<16x1xf32> to vector<16x32xf32>
    %49 = arith.mulf %44, %48 : vector<16x32xf32>
    %50 = vector.extract_strided_slice %8 {offsets = [1, 0], sizes = [1, 32], strides = [1, 1]} : vector<3x32xf32> to vector<1x32xf32>
    %51 = vector.broadcast %50 : vector<1x32xf32> to vector<16x32xf32>
    %52 = arith.mulf %49, %51 : vector<16x32xf32>
    %53 = vector.extract_strided_slice %8 {offsets = [2, 0], sizes = [1, 32], strides = [1, 1]} : vector<3x32xf32> to vector<1x32xf32>
    %54 = vector.broadcast %53 : vector<1x32xf32> to vector<16x32xf32>
    %55 = arith.addf %52, %54 : vector<16x32xf32>
    %56 = vector.shape_cast %55 : vector<16x32xf32> to vector<1x16x32xf32>
    %c1_33 = arith.constant 1 : index
    %c0_34 = arith.constant 0 : index
    %c0_35 = arith.constant 0 : index
    %57 = vector.load %arg2[%c1_33, %c0_34, %c0_35] : memref<2x96x32xbf16, #tpu.memory_space<vmem>>, vector<1x96x32xbf16>
    %58 = vector.shape_cast %57 : vector<1x96x32xbf16> to vector<96x32xbf16>
    %c1_36 = arith.constant 1 : index
    %c0_37 = arith.constant 0 : index
    %c0_38 = arith.constant 0 : index
    %59 = vector.load %arg3[%c1_36, %c0_37, %c0_38] : memref<2x3x32xf32, #tpu.memory_space<vmem>>, vector<1x3x32xf32>
    %60 = vector.shape_cast %59 : vector<1x3x32xf32> to vector<3x32xf32>
    %cst_39 = arith.constant 0.000000e+00 : f32
    %61 = vector.broadcast %cst_39 : f32 to vector<1x16x32xf32>
    %62 = arith.maximumf %56, %61 : vector<1x16x32xf32>
    %63 = arith.truncf %62 : vector<1x16x32xf32> to vector<1x16x32xbf16>
    %c0_40 = arith.constant 0 : index
    %c1_41 = arith.constant 1 : index
    %c0_42 = arith.constant 0 : index
    %64 = vector.load %arg5[%c0_40, %c1_41, %c0_42] : memref<1x18x32xbf16, #tpu.memory_space<vmem>>, vector<1x16x32xbf16>
    tpu.vector_store %arg5[%c0_40, %c1_41, %c0_42], %63 {strides = array<i32>} : memref<1x18x32xbf16, #tpu.memory_space<vmem>>, vector<1x16x32xbf16>,
    %c0_43 = arith.constant 0 : index
    %c0_44 = arith.constant 0 : index
    %c0_45 = arith.constant 0 : index
    %65 = vector.load %arg5[%c0_43, %c0_44, %c0_45] : memref<1x18x32xbf16, #tpu.memory_space<vmem>>, vector<1x16x32xbf16>
    %66 = vector.shape_cast %65 : vector<1x16x32xbf16> to vector<16x32xbf16>
    %67 = vector.extract_strided_slice %58 {offsets = [0, 0], sizes = [32, 32], strides = [1, 1]} : vector<96x32xbf16> to vector<32x32xbf16>
    %cst_46 = arith.constant dense<0.000000e+00> : vector<16x32xf32>
    %68 = tpu.matmul %66, %67, %cst_46 {dimension_numbers = #tpu.dot_dimension_numbers<[1], [0], [0], [1], [0, 0, 1, 1], [], []>} : vector<16x32xbf16>, vector<32x32xbf16>, vector<16x32xf32> -> vector<16x32xf32>
    %c0_47 = arith.constant 0 : index
    %c1_48 = arith.constant 1 : index
    %c0_49 = arith.constant 0 : index
    %69 = vector.load %arg5[%c0_47, %c1_48, %c0_49] : memref<1x18x32xbf16, #tpu.memory_space<vmem>>, vector<1x16x32xbf16>
    %70 = vector.shape_cast %69 : vector<1x16x32xbf16> to vector<16x32xbf16>
    %71 = vector.extract_strided_slice %58 {offsets = [32, 0], sizes = [32, 32], strides = [1, 1]} : vector<96x32xbf16> to vector<32x32xbf16>
    %cst_50 = arith.constant dense<0.000000e+00> : vector<16x32xf32>
    %72 = tpu.matmul %70, %71, %cst_50 {dimension_numbers = #tpu.dot_dimension_numbers<[1], [0], [0], [1], [0, 0, 1, 1], [], []>} : vector<16x32xbf16>, vector<32x32xbf16>, vector<16x32xf32> -> vector<16x32xf32>
    %73 = arith.addf %68, %72 : vector<16x32xf32>
    %c0_51 = arith.constant 0 : index
    %c2_52 = arith.constant 2 : index
    %c0_53 = arith.constant 0 : index
    %74 = vector.load %arg5[%c0_51, %c2_52, %c0_53] : memref<1x18x32xbf16, #tpu.memory_space<vmem>>, vector<1x16x32xbf16>
    %75 = vector.shape_cast %74 : vector<1x16x32xbf16> to vector<16x32xbf16>
    %76 = vector.extract_strided_slice %58 {offsets = [64, 0], sizes = [32, 32], strides = [1, 1]} : vector<96x32xbf16> to vector<32x32xbf16>
    %cst_54 = arith.constant dense<0.000000e+00> : vector<16x32xf32>
    %77 = tpu.matmul %75, %76, %cst_54 {dimension_numbers = #tpu.dot_dimension_numbers<[1], [0], [0], [1], [0, 0, 1, 1], [], []>} : vector<16x32xbf16>, vector<32x32xbf16>, vector<16x32xf32> -> vector<16x32xf32>
    %78 = arith.addf %73, %77 : vector<16x32xf32>
    %79 = vector.extract_strided_slice %60 {offsets = [0, 0], sizes = [1, 32], strides = [1, 1]} : vector<3x32xf32> to vector<1x32xf32>
    %80 = vector.broadcast %79 : vector<1x32xf32> to vector<16x32xf32>
    %81 = arith.addf %78, %80 : vector<16x32xf32>
    %cst_55 = arith.constant dense<0.000000e+00> : vector<16xf32>
    %82 = vector.multi_reduction <add>, %81, %cst_55 [1] : vector<16x32xf32> to vector<16xf32>
    %83 = vector.shape_cast %82 : vector<16xf32> to vector<16x1xf32>
    %cst_56 = arith.constant 3.200000e+01 : f32
    %84 = vector.broadcast %cst_56 : f32 to vector<16x1xf32>
    %85 = arith.divf %83, %84 : vector<16x1xf32>
    %86 = arith.mulf %81, %81 : vector<16x32xf32>
    %cst_57 = arith.constant dense<0.000000e+00> : vector<16xf32>
    %87 = vector.multi_reduction <add>, %86, %cst_57 [1] : vector<16x32xf32> to vector<16xf32>
    %88 = vector.shape_cast %87 : vector<16xf32> to vector<16x1xf32>
    %cst_58 = arith.constant 3.200000e+01 : f32
    %89 = vector.broadcast %cst_58 : f32 to vector<16x1xf32>
    %90 = arith.divf %88, %89 : vector<16x1xf32>
    %91 = arith.mulf %85, %85 : vector<16x1xf32>
    %92 = arith.subf %90, %91 : vector<16x1xf32>
    %cst_59 = arith.constant 0.000000e+00 : f32
    %93 = vector.broadcast %cst_59 : f32 to vector<16x1xf32>
    %94 = arith.maximumf %92, %93 : vector<16x1xf32>
    %95 = vector.broadcast %85 : vector<16x1xf32> to vector<16x32xf32>
    %96 = arith.subf %81, %95 : vector<16x32xf32>
    %cst_60 = arith.constant 9.99999974E-6 : f32
    %97 = vector.broadcast %cst_60 : f32 to vector<16x1xf32>
    %98 = arith.addf %94, %97 : vector<16x1xf32>
    %99 = math.rsqrt %98 : vector<16x1xf32>
    %100 = vector.broadcast %99 : vector<16x1xf32> to vector<16x32xf32>
    %101 = arith.mulf %96, %100 : vector<16x32xf32>
    %102 = vector.extract_strided_slice %60 {offsets = [1, 0], sizes = [1, 32], strides = [1, 1]} : vector<3x32xf32> to vector<1x32xf32>
    %103 = vector.broadcast %102 : vector<1x32xf32> to vector<16x32xf32>
    %104 = arith.mulf %101, %103 : vector<16x32xf32>
    %105 = vector.extract_strided_slice %60 {offsets = [2, 0], sizes = [1, 32], strides = [1, 1]} : vector<3x32xf32> to vector<1x32xf32>
    %106 = vector.broadcast %105 : vector<1x32xf32> to vector<16x32xf32>
    %107 = arith.addf %104, %106 : vector<16x32xf32>
    %108 = vector.shape_cast %107 : vector<16x32xf32> to vector<1x16x32xf32>
    %c0_61 = arith.constant 0 : index
    %c0_62 = arith.constant 0 : index
    %c0_63 = arith.constant 0 : index
    %109 = vector.load %arg4[%c0_61, %c0_62, %c0_63] : memref<1x16x32xf32, #tpu.memory_space<vmem>>, vector<1x16x32xf32>
    tpu.vector_store %arg4[%c0_61, %c0_62, %c0_63], %108 {strides = array<i32>} : memref<1x16x32xf32, #tpu.memory_space<vmem>>, vector<1x16x32xf32>,
    return
  }
  func.func @transform_0(%arg0: i32) -> (i32, i32, i32) {
    %c0_i32 = arith.constant 0 : i32
    %c0_i32_0 = arith.constant 0 : i32
    %c0_i32_1 = arith.constant 0 : i32
    return %arg0, %c0_i32, %c0_i32_0 : i32, i32, i32
  }
  func.func @transform_1(%arg0: i32) -> (i32, i32, i32) {
    %c0_i32 = arith.constant 0 : i32
    %c0_i32_0 = arith.constant 0 : i32
    %c0_i32_1 = arith.constant 0 : i32
    %c0_i32_2 = arith.constant 0 : i32
    return %c0_i32, %c0_i32_0, %c0_i32_1 : i32, i32, i32
  }
  func.func @transform_2(%arg0: i32) -> (i32, i32, i32) {
    %c0_i32 = arith.constant 0 : i32
    %c0_i32_0 = arith.constant 0 : i32
    %c0_i32_1 = arith.constant 0 : i32
    %c0_i32_2 = arith.constant 0 : i32
    return %c0_i32, %c0_i32_0, %c0_i32_1 : i32, i32, i32
  }
  func.func @transform_3(%arg0: i32) -> (i32, i32, i32) {
    %c0_i32 = arith.constant 0 : i32
    %c0_i32_0 = arith.constant 0 : i32
    %c0_i32_1 = arith.constant 0 : i32
    return %arg0, %c0_i32, %c0_i32_0 : i32, i32, i32
  }
}

module attributes {stable_mosaic.version = 11 : i64} {
  func.func @_conv_stack_kernel(%arg0: i32, %arg1: memref<1x16x32xbf16, #tpu.memory_space<vmem>>, %arg2: memref<2x96x32xbf16, #tpu.memory_space<vmem>>, %arg3: memref<2x3x32xf32, #tpu.memory_space<vmem>>, %arg4: memref<1x16x32xf32, #tpu.memory_space<vmem>>, %arg5: memref<1x18x32xbf16, #tpu.memory_space<vmem>>) attributes {dimension_semantics = [#tpu.dimension_semantics<parallel>], iteration_bounds = array<i64: 2>, scalar_prefetch = 0 : i64, scratch_operands = 1 : i64, tpu.core_type = #tpu.core_type<tc>, window_params = [{transform_indices = @transform_0, window_bounds = array<i64: 1, 16, 32>}, {pipeline_mode = #tpu.pipeline_mode<synchronous>, transform_indices = @transform_1, window_bounds = array<i64: 2, 96, 32>}, {pipeline_mode = #tpu.pipeline_mode<synchronous>, transform_indices = @transform_2, window_bounds = array<i64: 2, 3, 32>}, {transform_indices = @transform_3, window_bounds = array<i64: 1, 16, 32>}]} {
    %cst = arith.constant 0.000000e+00 : bf16
    %0 = vector.broadcast %cst : bf16 to vector<1x1x32xbf16>
    %c0 = arith.constant 0 : index
    %c0_0 = arith.constant 0 : index
    %c0_1 = arith.constant 0 : index
    %1 = vector.load %arg5[%c0, %c0_0, %c0_1] : memref<1x18x32xbf16, #tpu.memory_space<vmem>>, vector<1x1x32xbf16>
    tpu.vector_store %arg5[%c0, %c0_0, %c0_1], %0 {strides = array<i32>} : memref<1x18x32xbf16, #tpu.memory_space<vmem>>, vector<1x1x32xbf16>,
    %c0_2 = arith.constant 0 : index
    %c17 = arith.constant 17 : index
    %c0_3 = arith.constant 0 : index
    %2 = vector.load %arg5[%c0_2, %c17, %c0_3] : memref<1x18x32xbf16, #tpu.memory_space<vmem>>, vector<1x1x32xbf16>
    tpu.vector_store %arg5[%c0_2, %c17, %c0_3], %0 {strides = array<i32>} : memref<1x18x32xbf16, #tpu.memory_space<vmem>>, vector<1x1x32xbf16>,
    %c0_4 = arith.constant 0 : index
    %c0_5 = arith.constant 0 : index
    %c0_6 = arith.constant 0 : index
    %3 = vector.load %arg1[%c0_4, %c0_5, %c0_6] : memref<1x16x32xbf16, #tpu.memory_space<vmem>>, vector<1x16x32xbf16>
    %4 = arith.extf %3 : vector<1x16x32xbf16> to vector<1x16x32xf32>
    %c0_7 = arith.constant 0 : index
    %c0_8 = arith.constant 0 : index
    %c0_9 = arith.constant 0 : index
    %5 = vector.load %arg2[%c0_7, %c0_8, %c0_9] : memref<2x96x32xbf16, #tpu.memory_space<vmem>>, vector<1x96x32xbf16>
    %6 = vector.shape_cast %5 : vector<1x96x32xbf16> to vector<96x32xbf16>
    %c0_10 = arith.constant 0 : index
    %c0_11 = arith.constant 0 : index
    %c0_12 = arith.constant 0 : index
    %7 = vector.load %arg3[%c0_10, %c0_11, %c0_12] : memref<2x3x32xf32, #tpu.memory_space<vmem>>, vector<1x3x32xf32>
    %8 = vector.shape_cast %7 : vector<1x3x32xf32> to vector<3x32xf32>
    %cst_13 = arith.constant 0.000000e+00 : f32
    %9 = vector.broadcast %cst_13 : f32 to vector<1x16x32xf32>
    %10 = arith.maximumf %4, %9 : vector<1x16x32xf32>
    %11 = arith.truncf %10 : vector<1x16x32xf32> to vector<1x16x32xbf16>
    %c0_14 = arith.constant 0 : index
    %c1 = arith.constant 1 : index
    %c0_15 = arith.constant 0 : index
    %12 = vector.load %arg5[%c0_14, %c1, %c0_15] : memref<1x18x32xbf16, #tpu.memory_space<vmem>>, vector<1x16x32xbf16>
    tpu.vector_store %arg5[%c0_14, %c1, %c0_15], %11 {strides = array<i32>} : memref<1x18x32xbf16, #tpu.memory_space<vmem>>, vector<1x16x32xbf16>,
    %c0_16 = arith.constant 0 : index
    %c0_17 = arith.constant 0 : index
    %c0_18 = arith.constant 0 : index
    %13 = vector.load %arg5[%c0_16, %c0_17, %c0_18] : memref<1x18x32xbf16, #tpu.memory_space<vmem>>, vector<1x16x32xbf16>
    %14 = vector.shape_cast %13 : vector<1x16x32xbf16> to vector<16x32xbf16>
    %15 = vector.extract_strided_slice %6 {offsets = [0, 0], sizes = [32, 32], strides = [1, 1]} : vector<96x32xbf16> to vector<32x32xbf16>
    %cst_19 = arith.constant dense<0.000000e+00> : vector<16x32xf32>
    %16 = tpu.matmul %14, %15, %cst_19 {dimension_numbers = #tpu.dot_dimension_numbers<[1], [0], [0], [1], [0, 0, 1, 1], [], []>} : vector<16x32xbf16>, vector<32x32xbf16>, vector<16x32xf32> -> vector<16x32xf32>
    %c0_20 = arith.constant 0 : index
    %c1_21 = arith.constant 1 : index
    %c0_22 = arith.constant 0 : index
    %17 = vector.load %arg5[%c0_20, %c1_21, %c0_22] : memref<1x18x32xbf16, #tpu.memory_space<vmem>>, vector<1x16x32xbf16>
    %18 = vector.shape_cast %17 : vector<1x16x32xbf16> to vector<16x32xbf16>
    %19 = vector.extract_strided_slice %6 {offsets = [32, 0], sizes = [32, 32], strides = [1, 1]} : vector<96x32xbf16> to vector<32x32xbf16>
    %cst_23 = arith.constant dense<0.000000e+00> : vector<16x32xf32>
    %20 = tpu.matmul %18, %19, %cst_23 {dimension_numbers = #tpu.dot_dimension_numbers<[1], [0], [0], [1], [0, 0, 1, 1], [], []>} : vector<16x32xbf16>, vector<32x32xbf16>, vector<16x32xf32> -> vector<16x32xf32>
    %21 = arith.addf %16, %20 : vector<16x32xf32>
    %c0_24 = arith.constant 0 : index
    %c2 = arith.constant 2 : index
    %c0_25 = arith.constant 0 : index
    %22 = vector.load %arg5[%c0_24, %c2, %c0_25] : memref<1x18x32xbf16, #tpu.memory_space<vmem>>, vector<1x16x32xbf16>
    %23 = vector.shape_cast %22 : vector<1x16x32xbf16> to vector<16x32xbf16>
    %24 = vector.extract_strided_slice %6 {offsets = [64, 0], sizes = [32, 32], strides = [1, 1]} : vector<96x32xbf16> to vector<32x32xbf16>
    %cst_26 = arith.constant dense<0.000000e+00> : vector<16x32xf32>
    %25 = tpu.matmul %23, %24, %cst_26 {dimension_numbers = #tpu.dot_dimension_numbers<[1], [0], [0], [1], [0, 0, 1, 1], [], []>} : vector<16x32xbf16>, vector<32x32xbf16>, vector<16x32xf32> -> vector<16x32xf32>
    %26 = arith.addf %21, %25 : vector<16x32xf32>
    %27 = vector.extract_strided_slice %8 {offsets = [0, 0], sizes = [1, 32], strides = [1, 1]} : vector<3x32xf32> to vector<1x32xf32>
    %28 = vector.broadcast %27 : vector<1x32xf32> to vector<16x32xf32>
    %29 = arith.addf %26, %28 : vector<16x32xf32>
    %cst_27 = arith.constant dense<0.000000e+00> : vector<16xf32>
    %30 = vector.multi_reduction <add>, %29, %cst_27 [1] : vector<16x32xf32> to vector<16xf32>
    %31 = vector.shape_cast %30 : vector<16xf32> to vector<16x1xf32>
    %cst_28 = arith.constant 3.200000e+01 : f32
    %32 = vector.broadcast %cst_28 : f32 to vector<16x1xf32>
    %33 = arith.divf %31, %32 : vector<16x1xf32>
    %34 = arith.mulf %29, %29 : vector<16x32xf32>
    %cst_29 = arith.constant dense<0.000000e+00> : vector<16xf32>
    %35 = vector.multi_reduction <add>, %34, %cst_29 [1] : vector<16x32xf32> to vector<16xf32>
    %36 = vector.shape_cast %35 : vector<16xf32> to vector<16x1xf32>
    %cst_30 = arith.constant 3.200000e+01 : f32
    %37 = vector.broadcast %cst_30 : f32 to vector<16x1xf32>
    %38 = arith.divf %36, %37 : vector<16x1xf32>
    %39 = arith.mulf %33, %33 : vector<16x1xf32>
    %40 = arith.subf %38, %39 : vector<16x1xf32>
    %cst_31 = arith.constant 0.000000e+00 : f32
    %41 = vector.broadcast %cst_31 : f32 to vector<16x1xf32>
    %42 = arith.maximumf %40, %41 : vector<16x1xf32>
    %43 = vector.broadcast %33 : vector<16x1xf32> to vector<16x32xf32>
    %44 = arith.subf %29, %43 : vector<16x32xf32>
    %cst_32 = arith.constant 9.99999974E-6 : f32
    %45 = vector.broadcast %cst_32 : f32 to vector<16x1xf32>
    %46 = arith.addf %42, %45 : vector<16x1xf32>
    %47 = math.rsqrt %46 : vector<16x1xf32>
    %48 = vector.broadcast %47 : vector<16x1xf32> to vector<16x32xf32>
    %49 = arith.mulf %44, %48 : vector<16x32xf32>
    %50 = vector.extract_strided_slice %8 {offsets = [1, 0], sizes = [1, 32], strides = [1, 1]} : vector<3x32xf32> to vector<1x32xf32>
    %51 = vector.broadcast %50 : vector<1x32xf32> to vector<16x32xf32>
    %52 = arith.mulf %49, %51 : vector<16x32xf32>
    %53 = vector.extract_strided_slice %8 {offsets = [2, 0], sizes = [1, 32], strides = [1, 1]} : vector<3x32xf32> to vector<1x32xf32>
    %54 = vector.broadcast %53 : vector<1x32xf32> to vector<16x32xf32>
    %55 = arith.addf %52, %54 : vector<16x32xf32>
    %56 = vector.shape_cast %55 : vector<16x32xf32> to vector<1x16x32xf32>
    %c1_33 = arith.constant 1 : index
    %c0_34 = arith.constant 0 : index
    %c0_35 = arith.constant 0 : index
    %57 = vector.load %arg2[%c1_33, %c0_34, %c0_35] : memref<2x96x32xbf16, #tpu.memory_space<vmem>>, vector<1x96x32xbf16>
    %58 = vector.shape_cast %57 : vector<1x96x32xbf16> to vector<96x32xbf16>
    %c1_36 = arith.constant 1 : index
    %c0_37 = arith.constant 0 : index
    %c0_38 = arith.constant 0 : index
    %59 = vector.load %arg3[%c1_36, %c0_37, %c0_38] : memref<2x3x32xf32, #tpu.memory_space<vmem>>, vector<1x3x32xf32>
    %60 = vector.shape_cast %59 : vector<1x3x32xf32> to vector<3x32xf32>
    %cst_39 = arith.constant 0.000000e+00 : f32
    %61 = vector.broadcast %cst_39 : f32 to vector<1x16x32xf32>
    %62 = arith.maximumf %56, %61 : vector<1x16x32xf32>
    %63 = arith.truncf %62 : vector<1x16x32xf32> to vector<1x16x32xbf16>
    %c0_40 = arith.constant 0 : index
    %c1_41 = arith.constant 1 : index
    %c0_42 = arith.constant 0 : index
    %64 = vector.load %arg5[%c0_40, %c1_41, %c0_42] : memref<1x18x32xbf16, #tpu.memory_space<vmem>>, vector<1x16x32xbf16>
    tpu.vector_store %arg5[%c0_40, %c1_41, %c0_42], %63 {strides = array<i32>} : memref<1x18x32xbf16, #tpu.memory_space<vmem>>, vector<1x16x32xbf16>,
    %c0_43 = arith.constant 0 : index
    %c0_44 = arith.constant 0 : index
    %c0_45 = arith.constant 0 : index
    %65 = vector.load %arg5[%c0_43, %c0_44, %c0_45] : memref<1x18x32xbf16, #tpu.memory_space<vmem>>, vector<1x16x32xbf16>
    %66 = vector.shape_cast %65 : vector<1x16x32xbf16> to vector<16x32xbf16>
    %67 = vector.extract_strided_slice %58 {offsets = [0, 0], sizes = [32, 32], strides = [1, 1]} : vector<96x32xbf16> to vector<32x32xbf16>
    %cst_46 = arith.constant dense<0.000000e+00> : vector<16x32xf32>
    %68 = tpu.matmul %66, %67, %cst_46 {dimension_numbers = #tpu.dot_dimension_numbers<[1], [0], [0], [1], [0, 0, 1, 1], [], []>} : vector<16x32xbf16>, vector<32x32xbf16>, vector<16x32xf32> -> vector<16x32xf32>
    %c0_47 = arith.constant 0 : index
    %c1_48 = arith.constant 1 : index
    %c0_49 = arith.constant 0 : index
    %69 = vector.load %arg5[%c0_47, %c1_48, %c0_49] : memref<1x18x32xbf16, #tpu.memory_space<vmem>>, vector<1x16x32xbf16>
    %70 = vector.shape_cast %69 : vector<1x16x32xbf16> to vector<16x32xbf16>
    %71 = vector.extract_strided_slice %58 {offsets = [32, 0], sizes = [32, 32], strides = [1, 1]} : vector<96x32xbf16> to vector<32x32xbf16>
    %cst_50 = arith.constant dense<0.000000e+00> : vector<16x32xf32>
    %72 = tpu.matmul %70, %71, %cst_50 {dimension_numbers = #tpu.dot_dimension_numbers<[1], [0], [0], [1], [0, 0, 1, 1], [], []>} : vector<16x32xbf16>, vector<32x32xbf16>, vector<16x32xf32> -> vector<16x32xf32>
    %73 = arith.addf %68, %72 : vector<16x32xf32>
    %c0_51 = arith.constant 0 : index
    %c2_52 = arith.constant 2 : index
    %c0_53 = arith.constant 0 : index
    %74 = vector.load %arg5[%c0_51, %c2_52, %c0_53] : memref<1x18x32xbf16, #tpu.memory_space<vmem>>, vector<1x16x32xbf16>
    %75 = vector.shape_cast %74 : vector<1x16x32xbf16> to vector<16x32xbf16>
    %76 = vector.extract_strided_slice %58 {offsets = [64, 0], sizes = [32, 32], strides = [1, 1]} : vector<96x32xbf16> to vector<32x32xbf16>
    %cst_54 = arith.constant dense<0.000000e+00> : vector<16x32xf32>
    %77 = tpu.matmul %75, %76, %cst_54 {dimension_numbers = #tpu.dot_dimension_numbers<[1], [0], [0], [1], [0, 0, 1, 1], [], []>} : vector<16x32xbf16>, vector<32x32xbf16>, vector<16x32xf32> -> vector<16x32xf32>
    %78 = arith.addf %73, %77 : vector<16x32xf32>
    %79 = vector.extract_strided_slice %60 {offsets = [0, 0], sizes = [1, 32], strides = [1, 1]} : vector<3x32xf32> to vector<1x32xf32>
    %80 = vector.broadcast %79 : vector<1x32xf32> to vector<16x32xf32>
    %81 = arith.addf %78, %80 : vector<16x32xf32>
    %cst_55 = arith.constant dense<0.000000e+00> : vector<16xf32>
    %82 = vector.multi_reduction <add>, %81, %cst_55 [1] : vector<16x32xf32> to vector<16xf32>
    %83 = vector.shape_cast %82 : vector<16xf32> to vector<16x1xf32>
    %cst_56 = arith.constant 3.200000e+01 : f32
    %84 = vector.broadcast %cst_56 : f32 to vector<16x1xf32>
    %85 = arith.divf %83, %84 : vector<16x1xf32>
    %86 = arith.mulf %81, %81 : vector<16x32xf32>
    %cst_57 = arith.constant dense<0.000000e+00> : vector<16xf32>
    %87 = vector.multi_reduction <add>, %86, %cst_57 [1] : vector<16x32xf32> to vector<16xf32>
    %88 = vector.shape_cast %87 : vector<16xf32> to vector<16x1xf32>
    %cst_58 = arith.constant 3.200000e+01 : f32
    %89 = vector.broadcast %cst_58 : f32 to vector<16x1xf32>
    %90 = arith.divf %88, %89 : vector<16x1xf32>
    %91 = arith.mulf %85, %85 : vector<16x1xf32>
    %92 = arith.subf %90, %91 : vector<16x1xf32>
    %cst_59 = arith.constant 0.000000e+00 : f32
    %93 = vector.broadcast %cst_59 : f32 to vector<16x1xf32>
    %94 = arith.maximumf %92, %93 : vector<16x1xf32>
    %95 = vector.broadcast %85 : vector<16x1xf32> to vector<16x32xf32>
    %96 = arith.subf %81, %95 : vector<16x32xf32>
    %cst_60 = arith.constant 9.99999974E-6 : f32
    %97 = vector.broadcast %cst_60 : f32 to vector<16x1xf32>
    %98 = arith.addf %94, %97 : vector<16x1xf32>
    %99 = math.rsqrt %98 : vector<16x1xf32>
    %100 = vector.broadcast %99 : vector<16x1xf32> to vector<16x32xf32>
    %101 = arith.mulf %96, %100 : vector<16x32xf32>
    %102 = vector.extract_strided_slice %60 {offsets = [1, 0], sizes = [1, 32], strides = [1, 1]} : vector<3x32xf32> to vector<1x32xf32>
    %103 = vector.broadcast %102 : vector<1x32xf32> to vector<16x32xf32>
    %104 = arith.mulf %101, %103 : vector<16x32xf32>
    %105 = vector.extract_strided_slice %60 {offsets = [2, 0], sizes = [1, 32], strides = [1, 1]} : vector<3x32xf32> to vector<1x32xf32>
    %106 = vector.broadcast %105 : vector<1x32xf32> to vector<16x32xf32>
    %107 = arith.addf %104, %106 : vector<16x32xf32>
    %108 = vector.shape_cast %107 : vector<16x32xf32> to vector<1x16x32xf32>
    %c0_61 = arith.constant 0 : index
    %c0_62 = arith.constant 0 : index
    %c0_63 = arith.constant 0 : index
    %109 = vector.load %arg4[%c0_61, %c0_62, %c0_63] : memref<1x16x32xf32, #tpu.memory_space<vmem>>, vector<1x16x32xf32>
    tpu.vector_store %arg4[%c0_61, %c0_62, %c0_63], %108 {strides = array<i32>} : memref<1x16x32xf32, #tpu.memory_space<vmem>>, vector<1x16x32xf32>,
    return
  }
  func.func @transform_0(%arg0: i32) -> (i32, i32, i32) {
    %c0_i32 = arith.constant 0 : i32
    %c0_i32_0 = arith.constant 0 : i32
    %c0_i32_1 = arith.constant 0 : i32
    return %arg0, %c0_i32, %c0_i32_0 : i32, i32, i32
  }
  func.func @transform_1(%arg0: i32) -> (i32, i32, i32) {
    %c0_i32 = arith.constant 0 : i32
    %c0_i32_0 = arith.constant 0 : i32
    %c0_i32_1 = arith.constant 0 : i32
    %c0_i32_2 = arith.constant 0 : i32
    return %c0_i32, %c0_i32_0, %c0_i32_1 : i32, i32, i32
  }
  func.func @transform_2(%arg0: i32) -> (i32, i32, i32) {
    %c0_i32 = arith.constant 0 : i32
    %c0_i32_0 = arith.constant 0 : i32
    %c0_i32_1 = arith.constant 0 : i32
    %c0_i32_2 = arith.constant 0 : i32
    return %c0_i32, %c0_i32_0, %c0_i32_1 : i32, i32, i32
  }
  func.func @transform_3(%arg0: i32) -> (i32, i32, i32) {
    %c0_i32 = arith.constant 0 : i32
    %c0_i32_0 = arith.constant 0 : i32
    %c0_i32_1 = arith.constant 0 : i32
    return %arg0, %c0_i32, %c0_i32_0 : i32, i32, i32
  }
}

</mosaic_0001>

<llo_original>
// kernel: tpu_custom_call.1
$region0: #{tpu_custom_call.1}
  #allocation0 [shape = 'u32[]', space=smem, size = 0x4, offset = 0x4, fixed_abs, tag = 'smem constant byte address 0x4 - core index']
  #allocation1 [shape = 'u32[144,128]{1,0:T(1,128)}', space=vmem, size = 0x12000, scoped, tag = 'internal scratch']
  #allocation2 [shape = 'bf16[1,18,32]{2,1,0:T(8,128)(2,1)}', space=vmem, size = 0x1800, scoped, tag = 'scratch operand']
  %s0 = inlined_call_operand.vmem [shape: bf16[2,16,32], index: 0, kind: input, shape index: {}]
  %s1 = inlined_call_operand.vmem [shape: bf16[2,96,32], index: 1, kind: input, shape index: {}]
  %s2 = inlined_call_operand.vmem [shape: f32[2,3,32], index: 2, kind: input, shape index: {}]
  %s3 = inlined_call_operand.hbm [shape: f32[2,16,32], index: 3, kind: output, shape index: {}]
  %s4 = sld [smem:[#allocation0]]
  $region45: #{tpu_custom_call.1} parent=0
    _
  %s6 = ssub.s32 1, %s4
  %s7 = scalar_select 0, %s6, %s4
  $region1: #{tpu_custom_call.1} parent=0
    #allocation3 [shape = 'u8[16384]{0}', space=vmem, size = 0x4000, scoped, tag = 'output window, operand 0']
    #allocation4 [shape = 's32[2]{0}', space=sflag, size = 0x8, scoped, tag = 'scoped memory for tpu_custom_call.1']
    %8 = vsyncpa [#allocation4], 0
    %s9 = scalar_lea.sflag [#allocation4], 1
    %10 = vsyncpa %s9, 0
    loop: start=0, step=1, limit=4
    $region2: #{tpu_custom_call.1} parent=1 // loop_pre_header
      _
    $region3: #{tpu_custom_call.1} parent=1 // loop_header
      %s12 = sphi 0, %s16
      %p13 = scmp.ge.s32.totalorder %s12, 4
      %s22 = sphi 0, %s24
      %s25 = sphi 0, %s22
      %s26 = sphi 0, %s25
      %s42 = sphi 0, %s26
      %s46 = sphi 0, %s46
      %s48 = sphi 0, %s46
      %s49 = sphi 0, %s48
      %s63 = sphi 0, %s49
      %s67 = sphi 0, %s67
      %s69 = sphi 0, %s67
      %s70 = sphi 0, %s69
      %s84 = sphi 0, %s70
      %s90 = sphi 0, %s92
      %s93 = sphi 0, %s90
      %s94 = sphi 0, %s93
      %s110 = sphi 0, %s94
    $region4: #{tpu_custom_call.1} parent=1 // loop_header_branch
      %15 = sbr.rel (%p13) target = $region8
    $region5: #{tpu_custom_call.1} parent=1 // loop_body
      %s17 = ssub.s32 %s12, 1
      %s18 = ssub.s32 %s12, 2
      %s19 = sadd.s32 %s12, 1
      %s20 = ssub.s32 %s12, %s19
      %p21 = scmp.eq.s32.totalorder %s20, 0
      %s23 = sadd.s32 %s22, 1
      %s24 = scalar_select %p21, %s22, %s23
      %p27 = pneg %p21
      %p28 = scmp.eq.s32.totalorder %s12, 1
      %p29 = por %p27, %p28
      %p30 = scmp.ne.s32.totalorder %s22, %s25
      %p31 = scmp.eq.s32.totalorder %s12, 0
      %p32 = por %p30, %p31
      %p33 = scmp.ne.s32.totalorder %s22, %s25
      %p34 = scmp.eq.s32.totalorder %s17, 1
      %p35 = por %p33, %p34
      %p36 = scmp.ne.s32.totalorder %s25, %s26
      %p37 = scmp.eq.s32.totalorder %s17, 0
      %p38 = por %p36, %p37
      %p39 = scmp.ne.s32.totalorder %s25, %s26
      %p40 = scmp.eq.s32.totalorder %s18, 1
      %p41 = por %p39, %p40
      %p43 = scmp.ne.s32.totalorder %s26, %s42
      %p44 = scmp.eq.s32.totalorder %s18, 0
      %p45 = por %p43, %p44
      %s47 = sadd.s32 %s46, 1
      %p50 = scmp.eq.s32.totalorder %s12, 1
      %p51 = scmp.ne.s32.totalorder %s46, %s48
      %p52 = scmp.eq.s32.totalorder %s12, 0
      %p53 = por %p51, %p52
      %p54 = scmp.ne.s32.totalorder %s46, %s48
      %p55 = scmp.eq.s32.totalorder %s17, 1
      %p56 = por %p54, %p55
      %p57 = scmp.ne.s32.totalorder %s48, %s49
      %p58 = scmp.eq.s32.totalorder %s17, 0
      %p59 = por %p57, %p58
      %p60 = scmp.ne.s32.totalorder %s48, %s49
      %p61 = scmp.eq.s32.totalorder %s18, 1
      %p62 = por %p60, %p61
      %p64 = scmp.ne.s32.totalorder %s49, %s63
      %p65 = scmp.eq.s32.totalorder %s18, 0
      %p66 = por %p64, %p65
      %s68 = sadd.s32 %s67, 1
      %p71 = scmp.eq.s32.totalorder %s12, 1
      %p72 = scmp.ne.s32.totalorder %s67, %s69
      %p73 = scmp.eq.s32.totalorder %s12, 0
      %p74 = por %p72, %p73
      %p75 = scmp.ne.s32.totalorder %s67, %s69
      %p76 = scmp.eq.s32.totalorder %s17, 1
      %p77 = por %p75, %p76
      %p78 = scmp.ne.s32.totalorder %s69, %s70
      %p79 = scmp.eq.s32.totalorder %s17, 0
      %p80 = por %p78, %p79
      %p81 = scmp.ne.s32.totalorder %s69, %s70
      %p82 = scmp.eq.s32.totalorder %s18, 1
      %p83 = por %p81, %p82
      %p85 = scmp.ne.s32.totalorder %s70, %s84
      %p86 = scmp.eq.s32.totalorder %s18, 0
      %p87 = por %p85, %p86
      %s88 = ssub.s32 %s12, %s19
      %p89 = scmp.eq.s32.totalorder %s88, 0
      %s91 = sadd.s32 %s90, 1
      %s92 = scalar_select %p89, %s90, %s91
      %p95 = pneg %p89
      %p96 = scmp.eq.s32.totalorder %s12, 1
      %p97 = por %p95, %p96
      %p98 = scmp.ne.s32.totalorder %s90, %s93
      %p99 = scmp.eq.s32.totalorder %s12, 0
      %p100 = por %p98, %p99
      %p101 = scmp.ne.s32.totalorder %s90, %s93
      %p102 = scmp.eq.s32.totalorder %s17, 1
      %p103 = por %p101, %p102
      %p104 = scmp.ne.s32.totalorder %s93, %s94
      %p105 = scmp.eq.s32.totalorder %s17, 0
      %p106 = por %p104, %p105
      %p107 = scmp.ne.s32.totalorder %s93, %s94
      %p108 = scmp.eq.s32.totalorder %s18, 1
      %p109 = por %p107, %p108
      %p111 = scmp.ne.s32.totalorder %s94, %s110
      %p112 = scmp.eq.s32.totalorder %s18, 0
      %p113 = por %p111, %p112
      %p114 = scmp.le.s32.totalorder 1, %s12
      %p115 = scmp.lt.s32.totalorder %s12, 3
      %p116 = pnand %p114, %p115
      %p117 = pneg %p116
      // Predicated region
      $region9: #{tpu_custom_call.1} parent=5 // pred_check
        _
      $region10: #{tpu_custom_call.1} parent=5 // pred_check_branch
        %119 = sbr.rel (%p116) target = $region12
      $region11: #{tpu_custom_call.1} parent=5 // pred_region
        %s120 = ssub.s32 %s12, 1
        // Predicated region
        $region13: #{tpu_custom_call.1} parent=11 // pred_check
          %p121 = pneg %p59
        $region14: #{tpu_custom_call.1} parent=11 // pred_check_branch
          %123 = sbr.rel (%p121) target = $region16
        $region15: #{tpu_custom_call.1} parent=11 // pred_region
          _
        $region16: #{tpu_custom_call.1} parent=11 // pred_fallthru
          _
        // Predicated region
        $region17: #{tpu_custom_call.1} parent=11 // pred_check
          %p124 = pneg %p80
        $region18: #{tpu_custom_call.1} parent=11 // pred_check_branch
          %126 = sbr.rel (%p124) target = $region20
        $region19: #{tpu_custom_call.1} parent=11 // pred_region
          _
        $region20: #{tpu_custom_call.1} parent=11 // pred_fallthru
          _
      $region12: #{tpu_custom_call.1} parent=5 // pred_fallthru
        _
      %p127 = scmp.lt.s32.totalorder %s12, 2
      // Predicated region
      $region21: #{tpu_custom_call.1} parent=5 // pred_check
        %p128 = pneg %p127
      $region22: #{tpu_custom_call.1} parent=5 // pred_check_branch
        %130 = sbr.rel (%p128) target = $region24
      $region23: #{tpu_custom_call.1} parent=5 // pred_region
        // Predicated region
        $region25: #{tpu_custom_call.1} parent=23 // pred_check
          %p131 = pneg %p32
        $region26: #{tpu_custom_call.1} parent=23 // pred_check_branch
          %133 = sbr.rel (%p131) target = $region28
        $region27: #{tpu_custom_call.1} parent=23 // pred_region
          %p134 = scmp.lt.s32.totalorder %s12, 1
          %s135 = scalar_select %p134, %s12, 1
          %s136 = smul.addr %s135, 2
          %s137 = smul.addr %s136, 4
          %s138 = scalar_lea.vmem %s0, %s137
        $region28: #{tpu_custom_call.1} parent=23 // pred_fallthru
          _
      $region24: #{tpu_custom_call.1} parent=5 // pred_fallthru
        _
      %p139 = scmp.le.s32.totalorder 1, %s12
      %p140 = scmp.lt.s32.totalorder %s12, 3
      %p141 = pnand %p139, %p140
      %p142 = pneg %p141
      // Predicated region
      $region29: #{tpu_custom_call.1} parent=5 // pred_check
        _
      $region30: #{tpu_custom_call.1} parent=5 // pred_check_branch
        %144 = sbr.rel (%p141) target = $region32
      $region31: #{tpu_custom_call.1} parent=5 // pred_region
        %s145 = ssub.s32 %s12, 1
        %p146 = scmp.lt.s32.totalorder %s17, 1
        %s147 = scalar_select %p146, %s17, 1
        %s148 = smul.addr %s147, 2
        %s149 = smul.addr %s148, 4
        %s150 = scalar_lea.vmem %s0, %s149
        %p151 = pneg %p38
        %p152 = pneg %p35
        %p153 = pneg %p59
        %p154 = pneg %p56
        %p155 = pneg %p80
        %p156 = pneg %p77
        %p157 = pneg %p106
        %p158 = pneg %p103
        %s159 = sand.u32 %s93, 1
        %s160 = scalar_lea.sflag [#allocation4], %s159
        %s161 = sand.u32 %s93, 1
        %s162 = smul.addr %s161, 16
        %s163 = scalar_lea.vmem [#allocation3], %s162
        %p164 = scmp.lt.s32.totalorder %s17, 1
        %s165 = scalar_select %p164, %s17, 1
        %s166 = smul.addr %s165, 2
        %s167 = smul.addr %s166, 4
        %s168 = scalar_lea.vmem %s0, %s167
        %vm170 = vcmask 253952
        %vm171 = vsmask.f32 256
        %vm172 = vmand %vm170, %vm171
        %v173 = vld [vmem:[#allocation2] sm:$0x1]
        %v174 = vsel %vm172, 0, %v173
        %175 = vst [vmem:[#allocation2] sm:$0x1] %v174
        %vm176 = vsmask.f32 7938
        %vm177 = vmand %vm170, %vm176
        %v178 = vld [vmem:[#allocation2 + $0x8] sm:$0x1]
        %v179 = vsel %vm177, 0, %v178
        %180 = vst [vmem:[#allocation2 + $0x8] sm:$0x1] %v179
        %v181 = vld [vmem:[%s168] sm:$0xf]
        %v182 = vld [vmem:[%s168 + $0x4] sm:$0xf]
        %v183 = vunpack.c.l.bf16 %v181
        %v184 = vunpack.c.l.bf16 %v182
        %v185 = vld [vmem:[%s1] sm:$0xf]
        %v186 = vld [vmem:[%s1 + $0x4] sm:$0xf]
        %v187 = vld [vmem:[%s1 + $0x8] sm:$0xf]
        %v188 = vld [vmem:[%s1 + $0xc] sm:$0xf]
        %v189 = vld [vmem:[%s1 + $0x10] sm:$0xf]
        %v190 = vld [vmem:[%s1 + $0x14] sm:$0xf]
        %v191 = vld [vmem:[%s1 + $0x18] sm:$0xf]
        %v192 = vld [vmem:[%s1 + $0x1c] sm:$0xf]
        %v193 = vld [vmem:[%s1 + $0x20] sm:$0xf]
        %v194 = vld [vmem:[%s1 + $0x24] sm:$0xf]
        %v195 = vld [vmem:[%s1 + $0x28] sm:$0xf]
        %v196 = vld [vmem:[%s1 + $0x2c] sm:$0xf]
        %v197 = vld [vmem:[%s2] sm:$0x7]
        %v198 = vmax.f32 %v183, 0.0
        %v199 = vmax.f32 %v184, 0.0
        %v200 = vpack.c.bf16 %v199, %v198
        %v202 = vunpack.c.l.b16 %v200
        %v203 = vunpack.c.h.b16 %v200
        %v204 = vpack.c.b16 %v202, %v202
        %v205 = vpack.c.b16 %v203, %v203
        %vm206 = vsmask.f32 4368
        %vm207 = vmor %vm171, %vm206
        %v209 = vshrl.u32 %v204, 16
        %v211 = vrot.slane %v209, 7
        %v212 = vshll.u32 %v204, 16
        %v214 = vor.u32 %v211, %v212
        %v215 = vrot.slane %v211, 4
        %v217 = vshrl.u32 %v205, 16
        %v219 = vrot.slane %v217, 7
        %v220 = vshll.u32 %v205, 16
        %v222 = vor.u32 %v219, %v220
        %v223 = vsel %vm207, %v215, %v222
        %v224 = vrot.slane %v219, 4
        %vm228 = vcmask 257024
        %vm229 = vmand %vm228, %vm176
        %v230 = vld [vmem:[#allocation2] sm:$0xf]
        %v231 = vsel %vm229, %v214, %v230
        %232 = vst [vmem:[#allocation2] sm:$0xf] %v231
        %vm233 = vcmask 257024
        %234 = vst.msk [vmem:[#allocation2 + $0x4] sm:$0xf] %vm233, %v223
        %v235 = vld [vmem:[#allocation2 + $0x8] sm:$0x1]
        %v236 = vsel %vm172, %v224, %v235
        %237 = vst [vmem:[#allocation2 + $0x8] sm:$0x1] %v236
        %v238 = vld [vmem:[#allocation2] sm:$0xf]
        %v239 = vld [vmem:[#allocation2 + $0x4] sm:$0xf]
        %v240 = vld [vmem:[#allocation2 + $0x8] sm:$0x1]
        %v244 = vunpack.c.l.b16 %v238
        %v245 = vunpack.c.l.b16 %v239
        %v246 = vunpack.c.l.b16 %v240
        %v247 = vpack.c.b16 %v245, %v244
        %v248 = vpack.c.b16 %v246, %v246
        %vm249 = vsmask.f32 7424
        %v251 = vshrl.u32 %v247, 16
        %v253 = vshll.u32 %v247, 16
        %v255 = vrot.slane %v253, 1
        %v256 = vor.u32 %v251, %v255
        %v258 = vshll.u32 %v248, 16
        %v260 = vrot.slane %v258, 1
        %v261 = vsel %vm249, %v256, %v260
        %v266 = vunpack.c.l.b16 %v189
        %v267 = vunpack.c.l.b16 %v190
        %v268 = vunpack.c.l.b16 %v191
        %v269 = vunpack.c.l.b16 %v192
        %v270 = vpack.c.b16 %v267, %v266
        %v271 = vpack.c.b16 %v269, %v268
        %vm274 = vcmask 261120
        %v276 = vsel %vm274, %v261, 0
        %278 = vmatprep.subr.bf16.mxu0 0
        %279 = vmatpush1.bf16.msra.mxu0 0
        %280 = vmatprep.subr.bf16.mxu0 0
        %281 = vmatpush1.bf16.msra.mxu0 0
        %282 = vmatprep.subr.bf16.mxu0 0
        %283 = vmatpush1.bf16.msra.mxu0 0
        %284 = vmatprep.subr.bf16.mxu0 0
        %285 = vmatpush1.bf16.msra.mxu0 0
        %286 = vmatprep.subr.bf16.mxu0 0
        %287 = vmatpush1.bf16.msra.mxu0 0
        %288 = vmatprep.subr.bf16.mxu0 0
        %289 = vmatpush1.bf16.msra.mxu0 0
        %290 = vmatprep.subr.bf16.mxu0 0
        %291 = vmatpush1.bf16.msra.mxu0 %v271
        %292 = vmatprep.subr.bf16.mxu0 0
        %293 = vmatpush1.bf16.msra.mxu0 %v270
        %294 = vmatprep.subr.bf16.mxu0 0
        %295 = vmatpush2.bf16.msra.mxu0 0
        %296 = vmatprep.subr.bf16.mxu0 0
        %297 = vmatpush2.bf16.msra.mxu0 0
        %298 = vmatprep.subr.bf16.mxu0 0
        %299 = vmatpush2.bf16.msra.mxu0 0
        %300 = vmatprep.subr.bf16.mxu0 0
        %301 = vmatpush2.bf16.msra.mxu0 0
        %302 = vmatprep.subr.bf16.mxu0 0
        %303 = vmatpush2.bf16.msra.mxu0 0
        %304 = vmatprep.subr.bf16.mxu0 0
        %305 = vmatpush2.bf16.msra.mxu0 0
        %306 = vmatprep.subr.bf16.mxu0 0
        %307 = vmatpush2.bf16.msra.mxu0 0
        %308 = vmatprep.subr.bf16.mxu0 0
        %309 = vmatpush2.bf16.msra.mxu0 0
        %310 = vmatprep.mubr.bf16.mxu0 0
        %311 = vmatmul.mubr.bf16.gmra.mxu0 %v276
        %v312 = vpop.f32.mrf.mxu0
        %v313 = vadd.f32 0.0, %v312
        %v314 = vpop.f32.mrf.mxu0
        %v315 = vpop.f32.mrf.mxu0
        %v316 = vadd.f32 0.0, %v315
        %v317 = vpop.f32.mrf.mxu0
        %318 = vdwg.mxu0
        %v323 = vunpack.c.l.b16 %v185
        %v324 = vunpack.c.l.b16 %v186
        %v325 = vunpack.c.l.b16 %v187
        %v326 = vunpack.c.l.b16 %v188
        %v327 = vpack.c.b16 %v324, %v323
        %v328 = vpack.c.b16 %v326, %v325
        %v331 = vsel %vm274, %v247, 0
        %333 = vmatprep.subr.bf16.mxu0 0
        %334 = vmatpush1.bf16.msra.mxu0 0
        %335 = vmatprep.subr.bf16.mxu0 0
        %336 = vmatpush1.bf16.msra.mxu0 0
        %337 = vmatprep.subr.bf16.mxu0 0
        %338 = vmatpush1.bf16.msra.mxu0 0
        %339 = vmatprep.subr.bf16.mxu0 0
        %340 = vmatpush1.bf16.msra.mxu0 0
        %341 = vmatprep.subr.bf16.mxu0 0
        %342 = vmatpush1.bf16.msra.mxu0 0
        %343 = vmatprep.subr.bf16.mxu0 0
        %344 = vmatpush1.bf16.msra.mxu0 0
        %345 = vmatprep.subr.bf16.mxu0 0
        %346 = vmatpush1.bf16.msra.mxu0 %v328
        %347 = vmatprep.subr.bf16.mxu0 0
        %348 = vmatpush1.bf16.msra.mxu0 %v327
        %349 = vmatprep.subr.bf16.mxu0 0
        %350 = vmatpush2.bf16.msra.mxu0 0
        %351 = vmatprep.subr.bf16.mxu0 0
        %352 = vmatpush2.bf16.msra.mxu0 0
        %353 = vmatprep.subr.bf16.mxu0 0
        %354 = vmatpush2.bf16.msra.mxu0 0
        %355 = vmatprep.subr.bf16.mxu0 0
        %356 = vmatpush2.bf16.msra.mxu0 0
        %357 = vmatprep.subr.bf16.mxu0 0
        %358 = vmatpush2.bf16.msra.mxu0 0
        %359 = vmatprep.subr.bf16.mxu0 0
        %360 = vmatpush2.bf16.msra.mxu0 0
        %361 = vmatprep.subr.bf16.mxu0 0
        %362 = vmatpush2.bf16.msra.mxu0 0
        %363 = vmatprep.subr.bf16.mxu0 0
        %364 = vmatpush2.bf16.msra.mxu0 0
        %365 = vmatprep.mubr.bf16.mxu0 0
        %366 = vmatmul.mubr.bf16.gmra.mxu0 %v331
        %v367 = vpop.f32.mrf.mxu0
        %v368 = vadd.f32 %v313, %v367
        %v369 = vpop.f32.mrf.mxu0
        %v370 = vpop.f32.mrf.mxu0
        %v371 = vadd.f32 %v316, %v370
        %v372 = vpop.f32.mrf.mxu0
        %373 = vdwg.mxu0
        %v374 = vld [vmem:[#allocation2] sm:$0xe]
        %v376 = vunpack.c.l.b16 %v374
        %v377 = vpack.c.b16 %v245, %v376
        %vm378 = vcmask 1046528
        %v379 = vrot.slane %v377, 1
        %v380 = vrot.slane %v248, 1
        %v381 = vsel %vm378, %v379, %v380
        %v386 = vunpack.c.l.b16 %v193
        %v387 = vunpack.c.l.b16 %v194
        %v388 = vunpack.c.l.b16 %v195
        %v389 = vunpack.c.l.b16 %v196
        %v390 = vpack.c.b16 %v387, %v386
        %v391 = vpack.c.b16 %v389, %v388
        %v395 = vsel %vm274, %v381, 0
        %397 = vmatprep.subr.bf16.mxu0 0
        %398 = vmatpush1.bf16.msra.mxu0 0
        %399 = vmatprep.subr.bf16.mxu0 0
        %400 = vmatpush1.bf16.msra.mxu0 0
        %401 = vmatprep.subr.bf16.mxu0 0
        %402 = vmatpush1.bf16.msra.mxu0 0
        %403 = vmatprep.subr.bf16.mxu0 0
        %404 = vmatpush1.bf16.msra.mxu0 0
        %405 = vmatprep.subr.bf16.mxu0 0
        %406 = vmatpush1.bf16.msra.mxu0 0
        %407 = vmatprep.subr.bf16.mxu0 0
        %408 = vmatpush1.bf16.msra.mxu0 0
        %409 = vmatprep.subr.bf16.mxu0 0
        %410 = vmatpush1.bf16.msra.mxu0 %v391
        %411 = vmatprep.subr.bf16.mxu0 0
        %412 = vmatpush1.bf16.msra.mxu0 %v390
        %413 = vmatprep.subr.bf16.mxu0 0
        %414 = vmatpush2.bf16.msra.mxu0 0
        %415 = vmatprep.subr.bf16.mxu0 0
        %416 = vmatpush2.bf16.msra.mxu0 0
        %417 = vmatprep.subr.bf16.mxu0 0
        %418 = vmatpush2.bf16.msra.mxu0 0
        %419 = vmatprep.subr.bf16.mxu0 0
        %420 = vmatpush2.bf16.msra.mxu0 0
        %421 = vmatprep.subr.bf16.mxu0 0
        %422 = vmatpush2.bf16.msra.mxu0 0
        %423 = vmatprep.subr.bf16.mxu0 0
        %424 = vmatpush2.bf16.msra.mxu0 0
        %425 = vmatprep.subr.bf16.mxu0 0
        %426 = vmatpush2.bf16.msra.mxu0 0
        %427 = vmatprep.subr.bf16.mxu0 0
        %428 = vmatpush2.bf16.msra.mxu0 0
        %429 = vmatprep.mubr.bf16.mxu0 0
        %430 = vmatmul.mubr.bf16.gmra.mxu0 %v395
        %v431 = vpop.f32.mrf.mxu0
        %v432 = vadd.f32 0.0, %v431
        %v433 = vpop.f32.mrf.mxu0
        %v434 = vpop.f32.mrf.mxu0
        %v435 = vadd.f32 0.0, %v434
        %v436 = vpop.f32.mrf.mxu0
        %437 = vdwg.mxu0
        %v438 = vadd.f32 %v368, %v432
        %v439 = vadd.f32 %v371, %v435
        %v440 = vlaneseq
        %v441 = vshrl.u32 %v440, 7
        %v442 = vsub.s32 0, %v441
        %v443 = vrot.slane %v197, %v442
        %v444 = vadd.f32 %v438, %v443
        %v445 = vadd.f32 %v439, %v443
        %v446 = vsel %vm274, %v444, 0.0
        %447 = vadd.xlane.f32.xlu0 %v446
        %v448 = vpop.xlane.xlu0 %447
        %v449 = vsel %vm274, %v445, 0.0
        %450 = vadd.xlane.f32.xlu0 %v449
        %v451 = vpop.xlane.xlu0 %450
        %v452 = vrcp.pop 32.0
        %v453 = vmul.f32 %v448, %v452
        %v454 = vmul.f32 %v451, %v452
        %v455 = vmul.f32 %v444, %v444
        %v456 = vmul.f32 %v445, %v445
        %v457 = vsel %vm274, %v455, 0.0
        %458 = vadd.xlane.f32.xlu0 %v457
        %v459 = vpop.xlane.xlu0 %458
        %v460 = vsel %vm274, %v456, 0.0
        %461 = vadd.xlane.f32.xlu0 %v460
        %v462 = vpop.xlane.xlu0 %461
        %v463 = vmul.f32 %v459, %v452
        %v464 = vmul.f32 %v462, %v452
        %v465 = vmul.f32 %v453, %v453
        %v466 = vmul.f32 %v454, %v454
        %v467 = vsub.f32 %v463, %v465
        %v468 = vsub.f32 %v464, %v466
        %v469 = vmax.f32 %v467, 0.0
        %v470 = vmax.f32 %v468, 0.0
        %v471 = vsub.f32 %v444, %v453
        %v472 = vsub.f32 %v445, %v454
        %v473 = vadd.f32 %v469, 1e-05
        %v474 = vadd.f32 %v470, 1e-05
        %v475 = vrsqrt.pop %v473
        %v476 = vrsqrt.pop %v474
        %v477 = vmul.f32 %v471, %v475
        %v478 = vmul.f32 %v472, %v476
        %v479 = vlaneseq
        %v480 = vshrl.u32 %v479, 7
        %v481 = vsub.s32 1, %v480
        %v482 = vrot.slane %v197, %v481
        %v483 = vmul.f32 %v477, %v482
        %v484 = vmul.f32 %v478, %v482
        %v485 = vlaneseq
        %v486 = vshrl.u32 %v485, 7
        %v487 = vsub.s32 2, %v486
        %v488 = vrot.slane %v197, %v487
        %v489 = vadd.f32 %v483, %v488
        %v490 = vadd.f32 %v484, %v488
        %s491 = scalar_lea.vmem %s1, 48
        %v492 = vld [vmem:[%s491] sm:$0xf]
        %v493 = vld [vmem:[%s491 + $0x4] sm:$0xf]
        %v494 = vld [vmem:[%s491 + $0x8] sm:$0xf]
        %v495 = vld [vmem:[%s491 + $0xc] sm:$0xf]
        %v496 = vld [vmem:[%s491 + $0x10] sm:$0xf]
        %v497 = vld [vmem:[%s491 + $0x14] sm:$0xf]
        %v498 = vld [vmem:[%s491 + $0x18] sm:$0xf]
        %v499 = vld [vmem:[%s491 + $0x1c] sm:$0xf]
        %v500 = vld [vmem:[%s491 + $0x20] sm:$0xf]
        %v501 = vld [vmem:[%s491 + $0x24] sm:$0xf]
        %v502 = vld [vmem:[%s491 + $0x28] sm:$0xf]
        %v503 = vld [vmem:[%s491 + $0x2c] sm:$0xf]
        %s504 = scalar_lea.vmem %s2, 4
        %v505 = vld [vmem:[%s504] sm:$0x7]
        %v506 = vmax.f32 %v489, 0.0
        %v507 = vmax.f32 %v490, 0.0
        %v508 = vpack.c.bf16 %v507, %v506
        %v510 = vunpack.c.l.b16 %v508
        %v511 = vunpack.c.h.b16 %v508
        %v512 = vpack.c.b16 %v510, %v510
        %v513 = vpack.c.b16 %v511, %v511
        %v515 = vshrl.u32 %v512, 16
        %v517 = vrot.slane %v515, 7
        %v518 = vshll.u32 %v512, 16
        %v520 = vor.u32 %v517, %v518
        %v521 = vrot.slane %v517, 4
        %v523 = vshrl.u32 %v513, 16
        %v525 = vrot.slane %v523, 7
        %v526 = vshll.u32 %v513, 16
        %v528 = vor.u32 %v525, %v526
        %v529 = vsel %vm207, %v521, %v528
        %v530 = vrot.slane %v525, 4
        %v534 = vsel %vm229, %v520, %v238
        %535 = vst [vmem:[#allocation2] sm:$0xf] %v534
        %536 = vst.msk [vmem:[#allocation2 + $0x4] sm:$0xf] %vm233, %v529
        %v537 = vld [vmem:[#allocation2 + $0x8] sm:$0x1]
        %v538 = vsel %vm172, %v530, %v537
        %539 = vst [vmem:[#allocation2 + $0x8] sm:$0x1] %v538
        %v540 = vld [vmem:[#allocation2] sm:$0xf]
        %v541 = vld [vmem:[#allocation2 + $0x4] sm:$0xf]
        %v542 = vld [vmem:[#allocation2 + $0x8] sm:$0x1]
        %v546 = vunpack.c.l.b16 %v540
        %v547 = vunpack.c.l.b16 %v541
        %v548 = vunpack.c.l.b16 %v542
        %v549 = vpack.c.b16 %v547, %v546
        %v550 = vpack.c.b16 %v548, %v548
        %v552 = vshrl.u32 %v549, 16
        %v554 = vshll.u32 %v549, 16
        %v556 = vrot.slane %v554, 1
        %v557 = vor.u32 %v552, %v556
        %v559 = vshll.u32 %v550, 16
        %v561 = vrot.slane %v559, 1
        %v562 = vsel %vm249, %v557, %v561
        %v567 = vunpack.c.l.b16 %v496
        %v568 = vunpack.c.l.b16 %v497
        %v569 = vunpack.c.l.b16 %v498
        %v570 = vunpack.c.l.b16 %v499
        %v571 = vpack.c.b16 %v568, %v567
        %v572 = vpack.c.b16 %v570, %v569
        %v576 = vsel %vm274, %v562, 0
        %578 = vmatprep.subr.bf16.mxu0 0
        %579 = vmatpush1.bf16.msra.mxu0 0
        %580 = vmatprep.subr.bf16.mxu0 0
        %581 = vmatpush1.bf16.msra.mxu0 0
        %582 = vmatprep.subr.bf16.mxu0 0
        %583 = vmatpush1.bf16.msra.mxu0 0
        %584 = vmatprep.subr.bf16.mxu0 0
        %585 = vmatpush1.bf16.msra.mxu0 0
        %586 = vmatprep.subr.bf16.mxu0 0
        %587 = vmatpush1.bf16.msra.mxu0 0
        %588 = vmatprep.subr.bf16.mxu0 0
        %589 = vmatpush1.bf16.msra.mxu0 0
        %590 = vmatprep.subr.bf16.mxu0 0
        %591 = vmatpush1.bf16.msra.mxu0 %v572
        %592 = vmatprep.subr.bf16.mxu0 0
        %593 = vmatpush1.bf16.msra.mxu0 %v571
        %594 = vmatprep.subr.bf16.mxu0 0
        %595 = vmatpush2.bf16.msra.mxu0 0
        %596 = vmatprep.subr.bf16.mxu0 0
        %597 = vmatpush2.bf16.msra.mxu0 0
        %598 = vmatprep.subr.bf16.mxu0 0
        %599 = vmatpush2.bf16.msra.mxu0 0
        %600 = vmatprep.subr.bf16.mxu0 0
        %601 = vmatpush2.bf16.msra.mxu0 0
        %602 = vmatprep.subr.bf16.mxu0 0
        %603 = vmatpush2.bf16.msra.mxu0 0
        %604 = vmatprep.subr.bf16.mxu0 0
        %605 = vmatpush2.bf16.msra.mxu0 0
        %606 = vmatprep.subr.bf16.mxu0 0
        %607 = vmatpush2.bf16.msra.mxu0 0
        %608 = vmatprep.subr.bf16.mxu0 0
        %609 = vmatpush2.bf16.msra.mxu0 0
        %610 = vmatprep.mubr.bf16.mxu0 0
        %611 = vmatmul.mubr.bf16.gmra.mxu0 %v576
        %v612 = vpop.f32.mrf.mxu0
        %v613 = vadd.f32 0.0, %v612
        %v614 = vpop.f32.mrf.mxu0
        %v615 = vpop.f32.mrf.mxu0
        %v616 = vadd.f32 0.0, %v615
        %v617 = vpop.f32.mrf.mxu0
        %618 = vdwg.mxu0
        %v623 = vunpack.c.l.b16 %v492
        %v624 = vunpack.c.l.b16 %v493
        %v625 = vunpack.c.l.b16 %v494
        %v626 = vunpack.c.l.b16 %v495
        %v627 = vpack.c.b16 %v624, %v623
        %v628 = vpack.c.b16 %v626, %v625
        %v631 = vsel %vm274, %v549, 0
        %633 = vmatprep.subr.bf16.mxu0 0
        %634 = vmatpush1.bf16.msra.mxu0 0
        %635 = vmatprep.subr.bf16.mxu0 0
        %636 = vmatpush1.bf16.msra.mxu0 0
        %637 = vmatprep.subr.bf16.mxu0 0
        %638 = vmatpush1.bf16.msra.mxu0 0
        %639 = vmatprep.subr.bf16.mxu0 0
        %640 = vmatpush1.bf16.msra.mxu0 0
        %641 = vmatprep.subr.bf16.mxu0 0
        %642 = vmatpush1.bf16.msra.mxu0 0
        %643 = vmatprep.subr.bf16.mxu0 0
        %644 = vmatpush1.bf16.msra.mxu0 0
        %645 = vmatprep.subr.bf16.mxu0 0
        %646 = vmatpush1.bf16.msra.mxu0 %v628
        %647 = vmatprep.subr.bf16.mxu0 0
        %648 = vmatpush1.bf16.msra.mxu0 %v627
        %649 = vmatprep.subr.bf16.mxu0 0
        %650 = vmatpush2.bf16.msra.mxu0 0
        %651 = vmatprep.subr.bf16.mxu0 0
        %652 = vmatpush2.bf16.msra.mxu0 0
        %653 = vmatprep.subr.bf16.mxu0 0
        %654 = vmatpush2.bf16.msra.mxu0 0
        %655 = vmatprep.subr.bf16.mxu0 0
        %656 = vmatpush2.bf16.msra.mxu0 0
        %657 = vmatprep.subr.bf16.mxu0 0
        %658 = vmatpush2.bf16.msra.mxu0 0
        %659 = vmatprep.subr.bf16.mxu0 0
        %660 = vmatpush2.bf16.msra.mxu0 0
        %661 = vmatprep.subr.bf16.mxu0 0
        %662 = vmatpush2.bf16.msra.mxu0 0
        %663 = vmatprep.subr.bf16.mxu0 0
        %664 = vmatpush2.bf16.msra.mxu0 0
        %665 = vmatprep.mubr.bf16.mxu0 0
        %666 = vmatmul.mubr.bf16.gmra.mxu0 %v631
        %v667 = vpop.f32.mrf.mxu0
        %v668 = vadd.f32 %v613, %v667
        %v669 = vpop.f32.mrf.mxu0
        %v670 = vpop.f32.mrf.mxu0
        %v671 = vadd.f32 %v616, %v670
        %v672 = vpop.f32.mrf.mxu0
        %673 = vdwg.mxu0
        %v674 = vld [vmem:[#allocation2] sm:$0xe]
        %v676 = vunpack.c.l.b16 %v674
        %v677 = vpack.c.b16 %v547, %v676
        %v678 = vrot.slane %v677, 1
        %v679 = vrot.slane %v550, 1
        %v680 = vsel %vm378, %v678, %v679
        %v685 = vunpack.c.l.b16 %v500
        %v686 = vunpack.c.l.b16 %v501
        %v687 = vunpack.c.l.b16 %v502
        %v688 = vunpack.c.l.b16 %v503
        %v689 = vpack.c.b16 %v686, %v685
        %v690 = vpack.c.b16 %v688, %v687
        %v694 = vsel %vm274, %v680, 0
        %696 = vmatprep.subr.bf16.mxu0 0
        %697 = vmatpush1.bf16.msra.mxu0 0
        %698 = vmatprep.subr.bf16.mxu0 0
        %699 = vmatpush1.bf16.msra.mxu0 0
        %700 = vmatprep.subr.bf16.mxu0 0
        %701 = vmatpush1.bf16.msra.mxu0 0
        %702 = vmatprep.subr.bf16.mxu0 0
        %703 = vmatpush1.bf16.msra.mxu0 0
        %704 = vmatprep.subr.bf16.mxu0 0
        %705 = vmatpush1.bf16.msra.mxu0 0
        %706 = vmatprep.subr.bf16.mxu0 0
        %707 = vmatpush1.bf16.msra.mxu0 0
        %708 = vmatprep.subr.bf16.mxu0 0
        %709 = vmatpush1.bf16.msra.mxu0 %v690
        %710 = vmatprep.subr.bf16.mxu0 0
        %711 = vmatpush1.bf16.msra.mxu0 %v689
        %712 = vmatprep.subr.bf16.mxu0 0
        %713 = vmatpush2.bf16.msra.mxu0 0
        %714 = vmatprep.subr.bf16.mxu0 0
        %715 = vmatpush2.bf16.msra.mxu0 0
        %716 = vmatprep.subr.bf16.mxu0 0
        %717 = vmatpush2.bf16.msra.mxu0 0
        %718 = vmatprep.subr.bf16.mxu0 0
        %719 = vmatpush2.bf16.msra.mxu0 0
        %720 = vmatprep.subr.bf16.mxu0 0
        %721 = vmatpush2.bf16.msra.mxu0 0
        %722 = vmatprep.subr.bf16.mxu0 0
        %723 = vmatpush2.bf16.msra.mxu0 0
        %724 = vmatprep.subr.bf16.mxu0 0
        %725 = vmatpush2.bf16.msra.mxu0 0
        %726 = vmatprep.subr.bf16.mxu0 0
        %727 = vmatpush2.bf16.msra.mxu0 0
        %728 = vmatprep.mubr.bf16.mxu0 0
        %729 = vmatmul.mubr.bf16.gmra.mxu0 %v694
        %v730 = vpop.f32.mrf.mxu0
        %v731 = vadd.f32 0.0, %v730
        %v732 = vpop.f32.mrf.mxu0
        %v733 = vpop.f32.mrf.mxu0
        %v734 = vadd.f32 0.0, %v733
        %v735 = vpop.f32.mrf.mxu0
        %736 = vdwg.mxu0
        %v737 = vadd.f32 %v668, %v731
        %v738 = vadd.f32 %v671, %v734
        %v739 = vlaneseq
        %v740 = vshrl.u32 %v739, 7
        %v741 = vsub.s32 0, %v740
        %v742 = vrot.slane %v505, %v741
        %v743 = vadd.f32 %v737, %v742
        %v744 = vadd.f32 %v738, %v742
        %v745 = vsel %vm274, %v743, 0.0
        %746 = vadd.xlane.f32.xlu0 %v745
        %v747 = vpop.xlane.xlu0 %746
        %v748 = vsel %vm274, %v744, 0.0
        %749 = vadd.xlane.f32.xlu0 %v748
        %v750 = vpop.xlane.xlu0 %749
        %v751 = vmul.f32 %v747, %v452
        %v752 = vmul.f32 %v750, %v452
        %v753 = vmul.f32 %v743, %v743
        %v754 = vmul.f32 %v744, %v744
        %v755 = vsel %vm274, %v753, 0.0
        %756 = vadd.xlane.f32.xlu0 %v755
        %v757 = vpop.xlane.xlu0 %756
        %v758 = vsel %vm274, %v754, 0.0
        %759 = vadd.xlane.f32.xlu0 %v758
        %v760 = vpop.xlane.xlu0 %759
        %v761 = vmul.f32 %v757, %v452
        %v762 = vmul.f32 %v760, %v452
        %v763 = vmul.f32 %v751, %v751
        %v764 = vmul.f32 %v752, %v752
        %v765 = vsub.f32 %v761, %v763
        %v766 = vsub.f32 %v762, %v764
        %v767 = vmax.f32 %v765, 0.0
        %v768 = vmax.f32 %v766, 0.0
        %v769 = vsub.f32 %v743, %v751
        %v770 = vsub.f32 %v744, %v752
        %v771 = vadd.f32 %v767, 1e-05
        %v772 = vadd.f32 %v768, 1e-05
        %v773 = vrsqrt.pop %v771
        %v774 = vrsqrt.pop %v772
        %v775 = vmul.f32 %v769, %v773
        %v776 = vmul.f32 %v770, %v774
        %v777 = vlaneseq
        %v778 = vshrl.u32 %v777, 7
        %v779 = vsub.s32 1, %v778
        %v780 = vrot.slane %v505, %v779
        %v781 = vmul.f32 %v775, %v780
        %v782 = vmul.f32 %v776, %v780
        %v783 = vlaneseq
        %v784 = vshrl.u32 %v783, 7
        %v785 = vsub.s32 2, %v784
        %v786 = vrot.slane %v505, %v785
        %v787 = vadd.f32 %v781, %v786
        %v788 = vadd.f32 %v782, %v786
        %789 = vst.msk [vmem:[%s163] sm:$0xff] %vm274, %v787
        %790 = vst.msk [vmem:[%s163 + $0x8] sm:$0xff] %vm274, %v788
        %s791 = sand.u32 %s93, 1
        %s792 = scalar_lea.sflag [#allocation4], %s791
        %s793 = sand.u32 %s93, 1
        %s794 = smul.addr %s793, 16
        %s795 = scalar_lea.vmem [#allocation3], %s794
        // Predicated region
        $region33: #{tpu_custom_call.1} parent=31 // pred_check
          %p796 = pneg %p103
        $region34: #{tpu_custom_call.1} parent=31 // pred_check_branch
          %798 = sbr.rel (%p796) target = $region36
        $region35: #{tpu_custom_call.1} parent=31 // pred_region
          %s800 = ssub.s32 256, 256
          %801 = vsyncadd %s792, %s800
          %s802 = smul.addr %s17, 2
          %s803 = smul.addr %s802, 128
          %s804 = scalar_lea.hbm %s3, %s803
          %s805 = sshll.u32 %s795, 4
          %s806 = int_to_ptr.vmem [resolvable:$true] %s805
          %811 = dma.vmem_to_hbm [thread:$0]  %s806, 256, %s804, %s792, 128, 128, 8
        $region36: #{tpu_custom_call.1} parent=31 // pred_fallthru
          _
      $region32: #{tpu_custom_call.1} parent=5 // pred_fallthru
        _
      %p812 = scmp.le.s32.totalorder 2, %s12
      // Predicated region
      $region37: #{tpu_custom_call.1} parent=5 // pred_check
        %p813 = pneg %p812
      $region38: #{tpu_custom_call.1} parent=5 // pred_check_branch
        %815 = sbr.rel (%p813) target = $region40
      $region39: #{tpu_custom_call.1} parent=5 // pred_region
        %s816 = ssub.s32 %s12, 2
        // Predicated region
        $region41: #{tpu_custom_call.1} parent=39 // pred_check
          %p817 = pneg %p109
        $region42: #{tpu_custom_call.1} parent=39 // pred_check_branch
          %819 = sbr.rel (%p817) target = $region44
        $region43: #{tpu_custom_call.1} parent=39 // pred_region
          %s820 = sand.u32 %s94, 1
          %s821 = scalar_lea.sflag [#allocation4], %s820
          %s822 = sand.u32 %s94, 1
          %s823 = smul.addr %s822, 16
          %s824 = scalar_lea.vmem [#allocation3], %s823
          %825 = dma.done %s821, 256
        $region44: #{tpu_custom_call.1} parent=39 // pred_fallthru
          _
      $region40: #{tpu_custom_call.1} parent=5 // pred_fallthru
        _
    $region6: #{tpu_custom_call.1} parent=1 // loop_footer
      %s16 = sadd.s32 1, %s12
    $region7: #{tpu_custom_call.1} parent=1 // loop_footer_branch
      %11 = sbr.rel target = $region3
    $region8: #{tpu_custom_call.1} parent=1 // loop_exit
      _
    %826 = vsyncpa [#allocation4], 1
    %s827 = scalar_lea.sflag [#allocation4], 1
    %828 = vsyncpa %s827, 1

// kernel: tpu_custom_call.1
$region0: #{tpu_custom_call.1}
  #allocation0 [shape = 'u32[]', space=smem, size = 0x4, offset = 0x4, fixed_abs, tag = 'smem constant byte address 0x4 - core index']
  #allocation1 [shape = 'u32[144,128]{1,0:T(1,128)}', space=vmem, size = 0x12000, scoped, tag = 'internal scratch']
  #allocation2 [shape = 'bf16[1,18,32]{2,1,0:T(8,128)(2,1)}', space=vmem, size = 0x1800, scoped, tag = 'scratch operand']
  %s0 = inlined_call_operand.vmem [shape: bf16[2,16,32], index: 0, kind: input, shape index: {}]
  %s1 = inlined_call_operand.vmem [shape: bf16[2,96,32], index: 1, kind: input, shape index: {}]
  %s2 = inlined_call_operand.vmem [shape: f32[2,3,32], index: 2, kind: input, shape index: {}]
  %s3 = inlined_call_operand.hbm [shape: f32[2,16,32], index: 3, kind: output, shape index: {}]
  %s4 = sld [smem:[#allocation0]]
  $region45: #{tpu_custom_call.1} parent=0
    _
  %s6 = ssub.s32 1, %s4
  %s7 = scalar_select 0, %s6, %s4
  $region1: #{tpu_custom_call.1} parent=0
    #allocation3 [shape = 'u8[16384]{0}', space=vmem, size = 0x4000, scoped, tag = 'output window, operand 0']
    #allocation4 [shape = 's32[2]{0}', space=sflag, size = 0x8, scoped, tag = 'scoped memory for tpu_custom_call.1']
    %8 = vsyncpa [#allocation4], 0
    %s9 = scalar_lea.sflag [#allocation4], 1
    %10 = vsyncpa %s9, 0
    loop: start=0, step=1, limit=4
    $region2: #{tpu_custom_call.1} parent=1 // loop_pre_header
      _
    $region3: #{tpu_custom_call.1} parent=1 // loop_header
      %s12 = sphi 0, %s16
      %p13 = scmp.ge.s32.totalorder %s12, 4
      %s22 = sphi 0, %s24
      %s25 = sphi 0, %s22
      %s26 = sphi 0, %s25
      %s42 = sphi 0, %s26
      %s46 = sphi 0, %s46
      %s48 = sphi 0, %s46
      %s49 = sphi 0, %s48
      %s63 = sphi 0, %s49
      %s67 = sphi 0, %s67
      %s69 = sphi 0, %s67
      %s70 = sphi 0, %s69
      %s84 = sphi 0, %s70
      %s90 = sphi 0, %s92
      %s93 = sphi 0, %s90
      %s94 = sphi 0, %s93
      %s110 = sphi 0, %s94
    $region4: #{tpu_custom_call.1} parent=1 // loop_header_branch
      %15 = sbr.rel (%p13) target = $region8
    $region5: #{tpu_custom_call.1} parent=1 // loop_body
      %s17 = ssub.s32 %s12, 1
      %s18 = ssub.s32 %s12, 2
      %s19 = sadd.s32 %s12, 1
      %s20 = ssub.s32 %s12, %s19
      %p21 = scmp.eq.s32.totalorder %s20, 0
      %s23 = sadd.s32 %s22, 1
      %s24 = scalar_select %p21, %s22, %s23
      %p27 = pneg %p21
      %p28 = scmp.eq.s32.totalorder %s12, 1
      %p29 = por %p27, %p28
      %p30 = scmp.ne.s32.totalorder %s22, %s25
      %p31 = scmp.eq.s32.totalorder %s12, 0
      %p32 = por %p30, %p31
      %p33 = scmp.ne.s32.totalorder %s22, %s25
      %p34 = scmp.eq.s32.totalorder %s17, 1
      %p35 = por %p33, %p34
      %p36 = scmp.ne.s32.totalorder %s25, %s26
      %p37 = scmp.eq.s32.totalorder %s17, 0
      %p38 = por %p36, %p37
      %p39 = scmp.ne.s32.totalorder %s25, %s26
      %p40 = scmp.eq.s32.totalorder %s18, 1
      %p41 = por %p39, %p40
      %p43 = scmp.ne.s32.totalorder %s26, %s42
      %p44 = scmp.eq.s32.totalorder %s18, 0
      %p45 = por %p43, %p44
      %s47 = sadd.s32 %s46, 1
      %p50 = scmp.eq.s32.totalorder %s12, 1
      %p51 = scmp.ne.s32.totalorder %s46, %s48
      %p52 = scmp.eq.s32.totalorder %s12, 0
      %p53 = por %p51, %p52
      %p54 = scmp.ne.s32.totalorder %s46, %s48
      %p55 = scmp.eq.s32.totalorder %s17, 1
      %p56 = por %p54, %p55
      %p57 = scmp.ne.s32.totalorder %s48, %s49
      %p58 = scmp.eq.s32.totalorder %s17, 0
      %p59 = por %p57, %p58
      %p60 = scmp.ne.s32.totalorder %s48, %s49
      %p61 = scmp.eq.s32.totalorder %s18, 1
      %p62 = por %p60, %p61
      %p64 = scmp.ne.s32.totalorder %s49, %s63
      %p65 = scmp.eq.s32.totalorder %s18, 0
      %p66 = por %p64, %p65
      %s68 = sadd.s32 %s67, 1
      %p71 = scmp.eq.s32.totalorder %s12, 1
      %p72 = scmp.ne.s32.totalorder %s67, %s69
      %p73 = scmp.eq.s32.totalorder %s12, 0
      %p74 = por %p72, %p73
      %p75 = scmp.ne.s32.totalorder %s67, %s69
      %p76 = scmp.eq.s32.totalorder %s17, 1
      %p77 = por %p75, %p76
      %p78 = scmp.ne.s32.totalorder %s69, %s70
      %p79 = scmp.eq.s32.totalorder %s17, 0
      %p80 = por %p78, %p79
      %p81 = scmp.ne.s32.totalorder %s69, %s70
      %p82 = scmp.eq.s32.totalorder %s18, 1
      %p83 = por %p81, %p82
      %p85 = scmp.ne.s32.totalorder %s70, %s84
      %p86 = scmp.eq.s32.totalorder %s18, 0
      %p87 = por %p85, %p86
      %s88 = ssub.s32 %s12, %s19
      %p89 = scmp.eq.s32.totalorder %s88, 0
      %s91 = sadd.s32 %s90, 1
      %s92 = scalar_select %p89, %s90, %s91
      %p95 = pneg %p89
      %p96 = scmp.eq.s32.totalorder %s12, 1
      %p97 = por %p95, %p96
      %p98 = scmp.ne.s32.totalorder %s90, %s93
      %p99 = scmp.eq.s32.totalorder %s12, 0
      %p100 = por %p98, %p99
      %p101 = scmp.ne.s32.totalorder %s90, %s93
      %p102 = scmp.eq.s32.totalorder %s17, 1
      %p103 = por %p101, %p102
      %p104 = scmp.ne.s32.totalorder %s93, %s94
      %p105 = scmp.eq.s32.totalorder %s17, 0
      %p106 = por %p104, %p105
      %p107 = scmp.ne.s32.totalorder %s93, %s94
      %p108 = scmp.eq.s32.totalorder %s18, 1
      %p109 = por %p107, %p108
      %p111 = scmp.ne.s32.totalorder %s94, %s110
      %p112 = scmp.eq.s32.totalorder %s18, 0
      %p113 = por %p111, %p112
      %p114 = scmp.le.s32.totalorder 1, %s12
      %p115 = scmp.lt.s32.totalorder %s12, 3
      %p116 = pnand %p114, %p115
      %p117 = pneg %p116
      // Predicated region
      $region9: #{tpu_custom_call.1} parent=5 // pred_check
        _
      $region10: #{tpu_custom_call.1} parent=5 // pred_check_branch
        %119 = sbr.rel (%p116) target = $region12
      $region11: #{tpu_custom_call.1} parent=5 // pred_region
        %s120 = ssub.s32 %s12, 1
        // Predicated region
        $region13: #{tpu_custom_call.1} parent=11 // pred_check
          %p121 = pneg %p59
        $region14: #{tpu_custom_call.1} parent=11 // pred_check_branch
          %123 = sbr.rel (%p121) target = $region16
        $region15: #{tpu_custom_call.1} parent=11 // pred_region
          _
        $region16: #{tpu_custom_call.1} parent=11 // pred_fallthru
          _
        // Predicated region
        $region17: #{tpu_custom_call.1} parent=11 // pred_check
          %p124 = pneg %p80
        $region18: #{tpu_custom_call.1} parent=11 // pred_check_branch
          %126 = sbr.rel (%p124) target = $region20
        $region19: #{tpu_custom_call.1} parent=11 // pred_region
          _
        $region20: #{tpu_custom_call.1} parent=11 // pred_fallthru
          _
      $region12: #{tpu_custom_call.1} parent=5 // pred_fallthru
        _
      %p127 = scmp.lt.s32.totalorder %s12, 2
      // Predicated region
      $region21: #{tpu_custom_call.1} parent=5 // pred_check
        %p128 = pneg %p127
      $region22: #{tpu_custom_call.1} parent=5 // pred_check_branch
        %130 = sbr.rel (%p128) target = $region24
      $region23: #{tpu_custom_call.1} parent=5 // pred_region
        // Predicated region
        $region25: #{tpu_custom_call.1} parent=23 // pred_check
          %p131 = pneg %p32
        $region26: #{tpu_custom_call.1} parent=23 // pred_check_branch
          %133 = sbr.rel (%p131) target = $region28
        $region27: #{tpu_custom_call.1} parent=23 // pred_region
          %p134 = scmp.lt.s32.totalorder %s12, 1
          %s135 = scalar_select %p134, %s12, 1
          %s136 = smul.addr %s135, 2
          %s137 = smul.addr %s136, 4
          %s138 = scalar_lea.vmem %s0, %s137
        $region28: #{tpu_custom_call.1} parent=23 // pred_fallthru
          _
      $region24: #{tpu_custom_call.1} parent=5 // pred_fallthru
        _
      %p139 = scmp.le.s32.totalorder 1, %s12
      %p140 = scmp.lt.s32.totalorder %s12, 3
      %p141 = pnand %p139, %p140
      %p142 = pneg %p141
      // Predicated region
      $region29: #{tpu_custom_call.1} parent=5 // pred_check
        _
      $region30: #{tpu_custom_call.1} parent=5 // pred_check_branch
        %144 = sbr.rel (%p141) target = $region32
      $region31: #{tpu_custom_call.1} parent=5 // pred_region
        %s145 = ssub.s32 %s12, 1
        %p146 = scmp.lt.s32.totalorder %s17, 1
        %s147 = scalar_select %p146, %s17, 1
        %s148 = smul.addr %s147, 2
        %s149 = smul.addr %s148, 4
        %s150 = scalar_lea.vmem %s0, %s149
        %p151 = pneg %p38
        %p152 = pneg %p35
        %p153 = pneg %p59
        %p154 = pneg %p56
        %p155 = pneg %p80
        %p156 = pneg %p77
        %p157 = pneg %p106
        %p158 = pneg %p103
        %s159 = sand.u32 %s93, 1
        %s160 = scalar_lea.sflag [#allocation4], %s159
        %s161 = sand.u32 %s93, 1
        %s162 = smul.addr %s161, 16
        %s163 = scalar_lea.vmem [#allocation3], %s162
        %p164 = scmp.lt.s32.totalorder %s17, 1
        %s165 = scalar_select %p164, %s17, 1
        %s166 = smul.addr %s165, 2
        %s167 = smul.addr %s166, 4
        %s168 = scalar_lea.vmem %s0, %s167
        %vm170 = vcmask 253952
        %vm171 = vsmask.f32 256
        %vm172 = vmand %vm170, %vm171
        %v173 = vld [vmem:[#allocation2] sm:$0x1]
        %v174 = vsel %vm172, 0, %v173
        %175 = vst [vmem:[#allocation2] sm:$0x1] %v174
        %vm176 = vsmask.f32 7938
        %vm177 = vmand %vm170, %vm176
        %v178 = vld [vmem:[#allocation2 + $0x8] sm:$0x1]
        %v179 = vsel %vm177, 0, %v178
        %180 = vst [vmem:[#allocation2 + $0x8] sm:$0x1] %v179
        %v181 = vld [vmem:[%s168] sm:$0xf]
        %v182 = vld [vmem:[%s168 + $0x4] sm:$0xf]
        %v183 = vunpack.c.l.bf16 %v181
        %v184 = vunpack.c.l.bf16 %v182
        %v185 = vld [vmem:[%s1] sm:$0xf]
        %v186 = vld [vmem:[%s1 + $0x4] sm:$0xf]
        %v187 = vld [vmem:[%s1 + $0x8] sm:$0xf]
        %v188 = vld [vmem:[%s1 + $0xc] sm:$0xf]
        %v189 = vld [vmem:[%s1 + $0x10] sm:$0xf]
        %v190 = vld [vmem:[%s1 + $0x14] sm:$0xf]
        %v191 = vld [vmem:[%s1 + $0x18] sm:$0xf]
        %v192 = vld [vmem:[%s1 + $0x1c] sm:$0xf]
        %v193 = vld [vmem:[%s1 + $0x20] sm:$0xf]
        %v194 = vld [vmem:[%s1 + $0x24] sm:$0xf]
        %v195 = vld [vmem:[%s1 + $0x28] sm:$0xf]
        %v196 = vld [vmem:[%s1 + $0x2c] sm:$0xf]
        %v197 = vld [vmem:[%s2] sm:$0x7]
        %v198 = vmax.f32 %v183, 0.0
        %v199 = vmax.f32 %v184, 0.0
        %v200 = vpack.c.bf16 %v199, %v198
        %v202 = vunpack.c.l.b16 %v200
        %v203 = vunpack.c.h.b16 %v200
        %v204 = vpack.c.b16 %v202, %v202
        %v205 = vpack.c.b16 %v203, %v203
        %vm206 = vsmask.f32 4368
        %vm207 = vmor %vm171, %vm206
        %v209 = vshrl.u32 %v204, 16
        %v211 = vrot.slane %v209, 7
        %v212 = vshll.u32 %v204, 16
        %v214 = vor.u32 %v211, %v212
        %v215 = vrot.slane %v211, 4
        %v217 = vshrl.u32 %v205, 16
        %v219 = vrot.slane %v217, 7
        %v220 = vshll.u32 %v205, 16
        %v222 = vor.u32 %v219, %v220
        %v223 = vsel %vm207, %v215, %v222
        %v224 = vrot.slane %v219, 4
        %vm228 = vcmask 257024
        %vm229 = vmand %vm228, %vm176
        %v230 = vld [vmem:[#allocation2] sm:$0xf]
        %v231 = vsel %vm229, %v214, %v230
        %232 = vst [vmem:[#allocation2] sm:$0xf] %v231
        %vm233 = vcmask 257024
        %234 = vst.msk [vmem:[#allocation2 + $0x4] sm:$0xf] %vm233, %v223
        %v235 = vld [vmem:[#allocation2 + $0x8] sm:$0x1]
        %v236 = vsel %vm172, %v224, %v235
        %237 = vst [vmem:[#allocation2 + $0x8] sm:$0x1] %v236
        %v238 = vld [vmem:[#allocation2] sm:$0xf]
        %v239 = vld [vmem:[#allocation2 + $0x4] sm:$0xf]
        %v240 = vld [vmem:[#allocation2 + $0x8] sm:$0x1]
        %v244 = vunpack.c.l.b16 %v238
        %v245 = vunpack.c.l.b16 %v239
        %v246 = vunpack.c.l.b16 %v240
        %v247 = vpack.c.b16 %v245, %v244
        %v248 = vpack.c.b16 %v246, %v246
        %vm249 = vsmask.f32 7424
        %v251 = vshrl.u32 %v247, 16
        %v253 = vshll.u32 %v247, 16
        %v255 = vrot.slane %v253, 1
        %v256 = vor.u32 %v251, %v255
        %v258 = vshll.u32 %v248, 16
        %v260 = vrot.slane %v258, 1
        %v261 = vsel %vm249, %v256, %v260
        %v266 = vunpack.c.l.b16 %v189
        %v267 = vunpack.c.l.b16 %v190
        %v268 = vunpack.c.l.b16 %v191
        %v269 = vunpack.c.l.b16 %v192
        %v270 = vpack.c.b16 %v267, %v266
        %v271 = vpack.c.b16 %v269, %v268
        %vm274 = vcmask 261120
        %v276 = vsel %vm274, %v261, 0
        %278 = vmatprep.subr.bf16.mxu0 0
        %279 = vmatpush1.bf16.msra.mxu0 0
        %280 = vmatprep.subr.bf16.mxu0 0
        %281 = vmatpush1.bf16.msra.mxu0 0
        %282 = vmatprep.subr.bf16.mxu0 0
        %283 = vmatpush1.bf16.msra.mxu0 0
        %284 = vmatprep.subr.bf16.mxu0 0
        %285 = vmatpush1.bf16.msra.mxu0 0
        %286 = vmatprep.subr.bf16.mxu0 0
        %287 = vmatpush1.bf16.msra.mxu0 0
        %288 = vmatprep.subr.bf16.mxu0 0
        %289 = vmatpush1.bf16.msra.mxu0 0
        %290 = vmatprep.subr.bf16.mxu0 0
        %291 = vmatpush1.bf16.msra.mxu0 %v271
        %292 = vmatprep.subr.bf16.mxu0 0
        %293 = vmatpush1.bf16.msra.mxu0 %v270
        %294 = vmatprep.subr.bf16.mxu0 0
        %295 = vmatpush2.bf16.msra.mxu0 0
        %296 = vmatprep.subr.bf16.mxu0 0
        %297 = vmatpush2.bf16.msra.mxu0 0
        %298 = vmatprep.subr.bf16.mxu0 0
        %299 = vmatpush2.bf16.msra.mxu0 0
        %300 = vmatprep.subr.bf16.mxu0 0
        %301 = vmatpush2.bf16.msra.mxu0 0
        %302 = vmatprep.subr.bf16.mxu0 0
        %303 = vmatpush2.bf16.msra.mxu0 0
        %304 = vmatprep.subr.bf16.mxu0 0
        %305 = vmatpush2.bf16.msra.mxu0 0
        %306 = vmatprep.subr.bf16.mxu0 0
        %307 = vmatpush2.bf16.msra.mxu0 0
        %308 = vmatprep.subr.bf16.mxu0 0
        %309 = vmatpush2.bf16.msra.mxu0 0
        %310 = vmatprep.mubr.bf16.mxu0 0
        %311 = vmatmul.mubr.bf16.gmra.mxu0 %v276
        %v312 = vpop.f32.mrf.mxu0
        %v313 = vadd.f32 0.0, %v312
        %v314 = vpop.f32.mrf.mxu0
        %v315 = vpop.f32.mrf.mxu0
        %v316 = vadd.f32 0.0, %v315
        %v317 = vpop.f32.mrf.mxu0
        %318 = vdwg.mxu0
        %v323 = vunpack.c.l.b16 %v185
        %v324 = vunpack.c.l.b16 %v186
        %v325 = vunpack.c.l.b16 %v187
        %v326 = vunpack.c.l.b16 %v188
        %v327 = vpack.c.b16 %v324, %v323
        %v328 = vpack.c.b16 %v326, %v325
        %v331 = vsel %vm274, %v247, 0
        %333 = vmatprep.subr.bf16.mxu0 0
        %334 = vmatpush1.bf16.msra.mxu0 0
        %335 = vmatprep.subr.bf16.mxu0 0
        %336 = vmatpush1.bf16.msra.mxu0 0
        %337 = vmatprep.subr.bf16.mxu0 0
        %338 = vmatpush1.bf16.msra.mxu0 0
        %339 = vmatprep.subr.bf16.mxu0 0
        %340 = vmatpush1.bf16.msra.mxu0 0
        %341 = vmatprep.subr.bf16.mxu0 0
        %342 = vmatpush1.bf16.msra.mxu0 0
        %343 = vmatprep.subr.bf16.mxu0 0
        %344 = vmatpush1.bf16.msra.mxu0 0
        %345 = vmatprep.subr.bf16.mxu0 0
        %346 = vmatpush1.bf16.msra.mxu0 %v328
        %347 = vmatprep.subr.bf16.mxu0 0
        %348 = vmatpush1.bf16.msra.mxu0 %v327
        %349 = vmatprep.subr.bf16.mxu0 0
        %350 = vmatpush2.bf16.msra.mxu0 0
        %351 = vmatprep.subr.bf16.mxu0 0
        %352 = vmatpush2.bf16.msra.mxu0 0
        %353 = vmatprep.subr.bf16.mxu0 0
        %354 = vmatpush2.bf16.msra.mxu0 0
        %355 = vmatprep.subr.bf16.mxu0 0
        %356 = vmatpush2.bf16.msra.mxu0 0
        %357 = vmatprep.subr.bf16.mxu0 0
        %358 = vmatpush2.bf16.msra.mxu0 0
        %359 = vmatprep.subr.bf16.mxu0 0
        %360 = vmatpush2.bf16.msra.mxu0 0
        %361 = vmatprep.subr.bf16.mxu0 0
        %362 = vmatpush2.bf16.msra.mxu0 0
        %363 = vmatprep.subr.bf16.mxu0 0
        %364 = vmatpush2.bf16.msra.mxu0 0
        %365 = vmatprep.mubr.bf16.mxu0 0
        %366 = vmatmul.mubr.bf16.gmra.mxu0 %v331
        %v367 = vpop.f32.mrf.mxu0
        %v368 = vadd.f32 %v313, %v367
        %v369 = vpop.f32.mrf.mxu0
        %v370 = vpop.f32.mrf.mxu0
        %v371 = vadd.f32 %v316, %v370
        %v372 = vpop.f32.mrf.mxu0
        %373 = vdwg.mxu0
        %v374 = vld [vmem:[#allocation2] sm:$0xe]
        %v376 = vunpack.c.l.b16 %v374
        %v377 = vpack.c.b16 %v245, %v376
        %vm378 = vcmask 1046528
        %v379 = vrot.slane %v377, 1
        %v380 = vrot.slane %v248, 1
        %v381 = vsel %vm378, %v379, %v380
        %v386 = vunpack.c.l.b16 %v193
        %v387 = vunpack.c.l.b16 %v194
        %v388 = vunpack.c.l.b16 %v195
        %v389 = vunpack.c.l.b16 %v196
        %v390 = vpack.c.b16 %v387, %v386
        %v391 = vpack.c.b16 %v389, %v388
        %v395 = vsel %vm274, %v381, 0
        %397 = vmatprep.subr.bf16.mxu0 0
        %398 = vmatpush1.bf16.msra.mxu0 0
        %399 = vmatprep.subr.bf16.mxu0 0
        %400 = vmatpush1.bf16.msra.mxu0 0
        %401 = vmatprep.subr.bf16.mxu0 0
        %402 = vmatpush1.bf16.msra.mxu0 0
        %403 = vmatprep.subr.bf16.mxu0 0
        %404 = vmatpush1.bf16.msra.mxu0 0
        %405 = vmatprep.subr.bf16.mxu0 0
        %406 = vmatpush1.bf16.msra.mxu0 0
        %407 = vmatprep.subr.bf16.mxu0 0
        %408 = vmatpush1.bf16.msra.mxu0 0
        %409 = vmatprep.subr.bf16.mxu0 0
        %410 = vmatpush1.bf16.msra.mxu0 %v391
        %411 = vmatprep.subr.bf16.mxu0 0
        %412 = vmatpush1.bf16.msra.mxu0 %v390
        %413 = vmatprep.subr.bf16.mxu0 0
        %414 = vmatpush2.bf16.msra.mxu0 0
        %415 = vmatprep.subr.bf16.mxu0 0
        %416 = vmatpush2.bf16.msra.mxu0 0
        %417 = vmatprep.subr.bf16.mxu0 0
        %418 = vmatpush2.bf16.msra.mxu0 0
        %419 = vmatprep.subr.bf16.mxu0 0
        %420 = vmatpush2.bf16.msra.mxu0 0
        %421 = vmatprep.subr.bf16.mxu0 0
        %422 = vmatpush2.bf16.msra.mxu0 0
        %423 = vmatprep.subr.bf16.mxu0 0
        %424 = vmatpush2.bf16.msra.mxu0 0
        %425 = vmatprep.subr.bf16.mxu0 0
        %426 = vmatpush2.bf16.msra.mxu0 0
        %427 = vmatprep.subr.bf16.mxu0 0
        %428 = vmatpush2.bf16.msra.mxu0 0
        %429 = vmatprep.mubr.bf16.mxu0 0
        %430 = vmatmul.mubr.bf16.gmra.mxu0 %v395
        %v431 = vpop.f32.mrf.mxu0
        %v432 = vadd.f32 0.0, %v431
        %v433 = vpop.f32.mrf.mxu0
        %v434 = vpop.f32.mrf.mxu0
        %v435 = vadd.f32 0.0, %v434
        %v436 = vpop.f32.mrf.mxu0
        %437 = vdwg.mxu0
        %v438 = vadd.f32 %v368, %v432
        %v439 = vadd.f32 %v371, %v435
        %v440 = vlaneseq
        %v441 = vshrl.u32 %v440, 7
        %v442 = vsub.s32 0, %v441
        %v443 = vrot.slane %v197, %v442
        %v444 = vadd.f32 %v438, %v443
        %v445 = vadd.f32 %v439, %v443
        %v446 = vsel %vm274, %v444, 0.0
        %447 = vadd.xlane.f32.xlu0 %v446
        %v448 = vpop.xlane.xlu0 %447
        %v449 = vsel %vm274, %v445, 0.0
        %450 = vadd.xlane.f32.xlu0 %v449
        %v451 = vpop.xlane.xlu0 %450
        %v452 = vrcp.pop 32.0
        %v453 = vmul.f32 %v448, %v452
        %v454 = vmul.f32 %v451, %v452
        %v455 = vmul.f32 %v444, %v444
        %v456 = vmul.f32 %v445, %v445
        %v457 = vsel %vm274, %v455, 0.0
        %458 = vadd.xlane.f32.xlu0 %v457
        %v459 = vpop.xlane.xlu0 %458
        %v460 = vsel %vm274, %v456, 0.0
        %461 = vadd.xlane.f32.xlu0 %v460
        %v462 = vpop.xlane.xlu0 %461
        %v463 = vmul.f32 %v459, %v452
        %v464 = vmul.f32 %v462, %v452
        %v465 = vmul.f32 %v453, %v453
        %v466 = vmul.f32 %v454, %v454
        %v467 = vsub.f32 %v463, %v465
        %v468 = vsub.f32 %v464, %v466
        %v469 = vmax.f32 %v467, 0.0
        %v470 = vmax.f32 %v468, 0.0
        %v471 = vsub.f32 %v444, %v453
        %v472 = vsub.f32 %v445, %v454
        %v473 = vadd.f32 %v469, 1e-05
        %v474 = vadd.f32 %v470, 1e-05
        %v475 = vrsqrt.pop %v473
        %v476 = vrsqrt.pop %v474
        %v477 = vmul.f32 %v471, %v475
        %v478 = vmul.f32 %v472, %v476
        %v479 = vlaneseq
        %v480 = vshrl.u32 %v479, 7
        %v481 = vsub.s32 1, %v480
        %v482 = vrot.slane %v197, %v481
        %v483 = vmul.f32 %v477, %v482
        %v484 = vmul.f32 %v478, %v482
        %v485 = vlaneseq
        %v486 = vshrl.u32 %v485, 7
        %v487 = vsub.s32 2, %v486
        %v488 = vrot.slane %v197, %v487
        %v489 = vadd.f32 %v483, %v488
        %v490 = vadd.f32 %v484, %v488
        %s491 = scalar_lea.vmem %s1, 48
        %v492 = vld [vmem:[%s491] sm:$0xf]
        %v493 = vld [vmem:[%s491 + $0x4] sm:$0xf]
        %v494 = vld [vmem:[%s491 + $0x8] sm:$0xf]
        %v495 = vld [vmem:[%s491 + $0xc] sm:$0xf]
        %v496 = vld [vmem:[%s491 + $0x10] sm:$0xf]
        %v497 = vld [vmem:[%s491 + $0x14] sm:$0xf]
        %v498 = vld [vmem:[%s491 + $0x18] sm:$0xf]
        %v499 = vld [vmem:[%s491 + $0x1c] sm:$0xf]
        %v500 = vld [vmem:[%s491 + $0x20] sm:$0xf]
        %v501 = vld [vmem:[%s491 + $0x24] sm:$0xf]
        %v502 = vld [vmem:[%s491 + $0x28] sm:$0xf]
        %v503 = vld [vmem:[%s491 + $0x2c] sm:$0xf]
        %s504 = scalar_lea.vmem %s2, 4
        %v505 = vld [vmem:[%s504] sm:$0x7]
        %v506 = vmax.f32 %v489, 0.0
        %v507 = vmax.f32 %v490, 0.0
        %v508 = vpack.c.bf16 %v507, %v506
        %v510 = vunpack.c.l.b16 %v508
        %v511 = vunpack.c.h.b16 %v508
        %v512 = vpack.c.b16 %v510, %v510
        %v513 = vpack.c.b16 %v511, %v511
        %v515 = vshrl.u32 %v512, 16
        %v517 = vrot.slane %v515, 7
        %v518 = vshll.u32 %v512, 16
        %v520 = vor.u32 %v517, %v518
        %v521 = vrot.slane %v517, 4
        %v523 = vshrl.u32 %v513, 16
        %v525 = vrot.slane %v523, 7
        %v526 = vshll.u32 %v513, 16
        %v528 = vor.u32 %v525, %v526
        %v529 = vsel %vm207, %v521, %v528
        %v530 = vrot.slane %v525, 4
        %v534 = vsel %vm229, %v520, %v238
        %535 = vst [vmem:[#allocation2] sm:$0xf] %v534
        %536 = vst.msk [vmem:[#allocation2 + $0x4] sm:$0xf] %vm233, %v529
        %v537 = vld [vmem:[#allocation2 + $0x8] sm:$0x1]
        %v538 = vsel %vm172, %v530, %v537
        %539 = vst [vmem:[#allocation2 + $0x8] sm:$0x1] %v538
        %v540 = vld [vmem:[#allocation2] sm:$0xf]
        %v541 = vld [vmem:[#allocation2 + $0x4] sm:$0xf]
        %v542 = vld [vmem:[#allocation2 + $0x8] sm:$0x1]
        %v546 = vunpack.c.l.b16 %v540
        %v547 = vunpack.c.l.b16 %v541
        %v548 = vunpack.c.l.b16 %v542
        %v549 = vpack.c.b16 %v547, %v546
        %v550 = vpack.c.b16 %v548, %v548
        %v552 = vshrl.u32 %v549, 16
        %v554 = vshll.u32 %v549, 16
        %v556 = vrot.slane %v554, 1
        %v557 = vor.u32 %v552, %v556
        %v559 = vshll.u32 %v550, 16
        %v561 = vrot.slane %v559, 1
        %v562 = vsel %vm249, %v557, %v561
        %v567 = vunpack.c.l.b16 %v496
        %v568 = vunpack.c.l.b16 %v497
        %v569 = vunpack.c.l.b16 %v498
        %v570 = vunpack.c.l.b16 %v499
        %v571 = vpack.c.b16 %v568, %v567
        %v572 = vpack.c.b16 %v570, %v569
        %v576 = vsel %vm274, %v562, 0
        %578 = vmatprep.subr.bf16.mxu0 0
        %579 = vmatpush1.bf16.msra.mxu0 0
        %580 = vmatprep.subr.bf16.mxu0 0
        %581 = vmatpush1.bf16.msra.mxu0 0
        %582 = vmatprep.subr.bf16.mxu0 0
        %583 = vmatpush1.bf16.msra.mxu0 0
        %584 = vmatprep.subr.bf16.mxu0 0
        %585 = vmatpush1.bf16.msra.mxu0 0
        %586 = vmatprep.subr.bf16.mxu0 0
        %587 = vmatpush1.bf16.msra.mxu0 0
        %588 = vmatprep.subr.bf16.mxu0 0
        %589 = vmatpush1.bf16.msra.mxu0 0
        %590 = vmatprep.subr.bf16.mxu0 0
        %591 = vmatpush1.bf16.msra.mxu0 %v572
        %592 = vmatprep.subr.bf16.mxu0 0
        %593 = vmatpush1.bf16.msra.mxu0 %v571
        %594 = vmatprep.subr.bf16.mxu0 0
        %595 = vmatpush2.bf16.msra.mxu0 0
        %596 = vmatprep.subr.bf16.mxu0 0
        %597 = vmatpush2.bf16.msra.mxu0 0
        %598 = vmatprep.subr.bf16.mxu0 0
        %599 = vmatpush2.bf16.msra.mxu0 0
        %600 = vmatprep.subr.bf16.mxu0 0
        %601 = vmatpush2.bf16.msra.mxu0 0
        %602 = vmatprep.subr.bf16.mxu0 0
        %603 = vmatpush2.bf16.msra.mxu0 0
        %604 = vmatprep.subr.bf16.mxu0 0
        %605 = vmatpush2.bf16.msra.mxu0 0
        %606 = vmatprep.subr.bf16.mxu0 0
        %607 = vmatpush2.bf16.msra.mxu0 0
        %608 = vmatprep.subr.bf16.mxu0 0
        %609 = vmatpush2.bf16.msra.mxu0 0
        %610 = vmatprep.mubr.bf16.mxu0 0
        %611 = vmatmul.mubr.bf16.gmra.mxu0 %v576
        %v612 = vpop.f32.mrf.mxu0
        %v613 = vadd.f32 0.0, %v612
        %v614 = vpop.f32.mrf.mxu0
        %v615 = vpop.f32.mrf.mxu0
        %v616 = vadd.f32 0.0, %v615
        %v617 = vpop.f32.mrf.mxu0
        %618 = vdwg.mxu0
        %v623 = vunpack.c.l.b16 %v492
        %v624 = vunpack.c.l.b16 %v493
        %v625 = vunpack.c.l.b16 %v494
        %v626 = vunpack.c.l.b16 %v495
        %v627 = vpack.c.b16 %v624, %v623
        %v628 = vpack.c.b16 %v626, %v625
        %v631 = vsel %vm274, %v549, 0
        %633 = vmatprep.subr.bf16.mxu0 0
        %634 = vmatpush1.bf16.msra.mxu0 0
        %635 = vmatprep.subr.bf16.mxu0 0
        %636 = vmatpush1.bf16.msra.mxu0 0
        %637 = vmatprep.subr.bf16.mxu0 0
        %638 = vmatpush1.bf16.msra.mxu0 0
        %639 = vmatprep.subr.bf16.mxu0 0
        %640 = vmatpush1.bf16.msra.mxu0 0
        %641 = vmatprep.subr.bf16.mxu0 0
        %642 = vmatpush1.bf16.msra.mxu0 0
        %643 = vmatprep.subr.bf16.mxu0 0
        %644 = vmatpush1.bf16.msra.mxu0 0
        %645 = vmatprep.subr.bf16.mxu0 0
        %646 = vmatpush1.bf16.msra.mxu0 %v628
        %647 = vmatprep.subr.bf16.mxu0 0
        %648 = vmatpush1.bf16.msra.mxu0 %v627
        %649 = vmatprep.subr.bf16.mxu0 0
        %650 = vmatpush2.bf16.msra.mxu0 0
        %651 = vmatprep.subr.bf16.mxu0 0
        %652 = vmatpush2.bf16.msra.mxu0 0
        %653 = vmatprep.subr.bf16.mxu0 0
        %654 = vmatpush2.bf16.msra.mxu0 0
        %655 = vmatprep.subr.bf16.mxu0 0
        %656 = vmatpush2.bf16.msra.mxu0 0
        %657 = vmatprep.subr.bf16.mxu0 0
        %658 = vmatpush2.bf16.msra.mxu0 0
        %659 = vmatprep.subr.bf16.mxu0 0
        %660 = vmatpush2.bf16.msra.mxu0 0
        %661 = vmatprep.subr.bf16.mxu0 0
        %662 = vmatpush2.bf16.msra.mxu0 0
        %663 = vmatprep.subr.bf16.mxu0 0
        %664 = vmatpush2.bf16.msra.mxu0 0
        %665 = vmatprep.mubr.bf16.mxu0 0
        %666 = vmatmul.mubr.bf16.gmra.mxu0 %v631
        %v667 = vpop.f32.mrf.mxu0
        %v668 = vadd.f32 %v613, %v667
        %v669 = vpop.f32.mrf.mxu0
        %v670 = vpop.f32.mrf.mxu0
        %v671 = vadd.f32 %v616, %v670
        %v672 = vpop.f32.mrf.mxu0
        %673 = vdwg.mxu0
        %v674 = vld [vmem:[#allocation2] sm:$0xe]
        %v676 = vunpack.c.l.b16 %v674
        %v677 = vpack.c.b16 %v547, %v676
        %v678 = vrot.slane %v677, 1
        %v679 = vrot.slane %v550, 1
        %v680 = vsel %vm378, %v678, %v679
        %v685 = vunpack.c.l.b16 %v500
        %v686 = vunpack.c.l.b16 %v501
        %v687 = vunpack.c.l.b16 %v502
        %v688 = vunpack.c.l.b16 %v503
        %v689 = vpack.c.b16 %v686, %v685
        %v690 = vpack.c.b16 %v688, %v687
        %v694 = vsel %vm274, %v680, 0
        %696 = vmatprep.subr.bf16.mxu0 0
        %697 = vmatpush1.bf16.msra.mxu0 0
        %698 = vmatprep.subr.bf16.mxu0 0
        %699 = vmatpush1.bf16.msra.mxu0 0
        %700 = vmatprep.subr.bf16.mxu0 0
        %701 = vmatpush1.bf16.msra.mxu0 0
        %702 = vmatprep.subr.bf16.mxu0 0
        %703 = vmatpush1.bf16.msra.mxu0 0
        %704 = vmatprep.subr.bf16.mxu0 0
        %705 = vmatpush1.bf16.msra.mxu0 0
        %706 = vmatprep.subr.bf16.mxu0 0
        %707 = vmatpush1.bf16.msra.mxu0 0
        %708 = vmatprep.subr.bf16.mxu0 0
        %709 = vmatpush1.bf16.msra.mxu0 %v690
        %710 = vmatprep.subr.bf16.mxu0 0
        %711 = vmatpush1.bf16.msra.mxu0 %v689
        %712 = vmatprep.subr.bf16.mxu0 0
        %713 = vmatpush2.bf16.msra.mxu0 0
        %714 = vmatprep.subr.bf16.mxu0 0
        %715 = vmatpush2.bf16.msra.mxu0 0
        %716 = vmatprep.subr.bf16.mxu0 0
        %717 = vmatpush2.bf16.msra.mxu0 0
        %718 = vmatprep.subr.bf16.mxu0 0
        %719 = vmatpush2.bf16.msra.mxu0 0
        %720 = vmatprep.subr.bf16.mxu0 0
        %721 = vmatpush2.bf16.msra.mxu0 0
        %722 = vmatprep.subr.bf16.mxu0 0
        %723 = vmatpush2.bf16.msra.mxu0 0
        %724 = vmatprep.subr.bf16.mxu0 0
        %725 = vmatpush2.bf16.msra.mxu0 0
        %726 = vmatprep.subr.bf16.mxu0 0
        %727 = vmatpush2.bf16.msra.mxu0 0
        %728 = vmatprep.mubr.bf16.mxu0 0
        %729 = vmatmul.mubr.bf16.gmra.mxu0 %v694
        %v730 = vpop.f32.mrf.mxu0
        %v731 = vadd.f32 0.0, %v730
        %v732 = vpop.f32.mrf.mxu0
        %v733 = vpop.f32.mrf.mxu0
        %v734 = vadd.f32 0.0, %v733
        %v735 = vpop.f32.mrf.mxu0
        %736 = vdwg.mxu0
        %v737 = vadd.f32 %v668, %v731
        %v738 = vadd.f32 %v671, %v734
        %v739 = vlaneseq
        %v740 = vshrl.u32 %v739, 7
        %v741 = vsub.s32 0, %v740
        %v742 = vrot.slane %v505, %v741
        %v743 = vadd.f32 %v737, %v742
        %v744 = vadd.f32 %v738, %v742
        %v745 = vsel %vm274, %v743, 0.0
        %746 = vadd.xlane.f32.xlu0 %v745
        %v747 = vpop.xlane.xlu0 %746
        %v748 = vsel %vm274, %v744, 0.0
        %749 = vadd.xlane.f32.xlu0 %v748
        %v750 = vpop.xlane.xlu0 %749
        %v751 = vmul.f32 %v747, %v452
        %v752 = vmul.f32 %v750, %v452
        %v753 = vmul.f32 %v743, %v743
        %v754 = vmul.f32 %v744, %v744
        %v755 = vsel %vm274, %v753, 0.0
        %756 = vadd.xlane.f32.xlu0 %v755
        %v757 = vpop.xlane.xlu0 %756
        %v758 = vsel %vm274, %v754, 0.0
        %759 = vadd.xlane.f32.xlu0 %v758
        %v760 = vpop.xlane.xlu0 %759
        %v761 = vmul.f32 %v757, %v452
        %v762 = vmul.f32 %v760, %v452
        %v763 = vmul.f32 %v751, %v751
        %v764 = vmul.f32 %v752, %v752
        %v765 = vsub.f32 %v761, %v763
        %v766 = vsub.f32 %v762, %v764
        %v767 = vmax.f32 %v765, 0.0
        %v768 = vmax.f32 %v766, 0.0
        %v769 = vsub.f32 %v743, %v751
        %v770 = vsub.f32 %v744, %v752
        %v771 = vadd.f32 %v767, 1e-05
        %v772 = vadd.f32 %v768, 1e-05
        %v773 = vrsqrt.pop %v771
        %v774 = vrsqrt.pop %v772
        %v775 = vmul.f32 %v769, %v773
        %v776 = vmul.f32 %v770, %v774
        %v777 = vlaneseq
        %v778 = vshrl.u32 %v777, 7
        %v779 = vsub.s32 1, %v778
        %v780 = vrot.slane %v505, %v779
        %v781 = vmul.f32 %v775, %v780
        %v782 = vmul.f32 %v776, %v780
        %v783 = vlaneseq
        %v784 = vshrl.u32 %v783, 7
        %v785 = vsub.s32 2, %v784
        %v786 = vrot.slane %v505, %v785
        %v787 = vadd.f32 %v781, %v786
        %v788 = vadd.f32 %v782, %v786
        %789 = vst.msk [vmem:[%s163] sm:$0xff] %vm274, %v787
        %790 = vst.msk [vmem:[%s163 + $0x8] sm:$0xff] %vm274, %v788
        %s791 = sand.u32 %s93, 1
        %s792 = scalar_lea.sflag [#allocation4], %s791
        %s793 = sand.u32 %s93, 1
        %s794 = smul.addr %s793, 16
        %s795 = scalar_lea.vmem [#allocation3], %s794
        // Predicated region
        $region33: #{tpu_custom_call.1} parent=31 // pred_check
          %p796 = pneg %p103
        $region34: #{tpu_custom_call.1} parent=31 // pred_check_branch
          %798 = sbr.rel (%p796) target = $region36
        $region35: #{tpu_custom_call.1} parent=31 // pred_region
          %s800 = ssub.s32 256, 256
          %801 = vsyncadd %s792, %s800
          %s802 = smul.addr %s17, 2
          %s803 = smul.addr %s802, 128
          %s804 = scalar_lea.hbm %s3, %s803
          %s805 = sshll.u32 %s795, 4
          %s806 = int_to_ptr.vmem [resolvable:$true] %s805
          %811 = dma.vmem_to_hbm [thread:$0]  %s806, 256, %s804, %s792, 128, 128, 8
        $region36: #{tpu_custom_call.1} parent=31 // pred_fallthru
          _
      $region32: #{tpu_custom_call.1} parent=5 // pred_fallthru
        _
      %p812 = scmp.le.s32.totalorder 2, %s12
      // Predicated region
      $region37: #{tpu_custom_call.1} parent=5 // pred_check
        %p813 = pneg %p812
      $region38: #{tpu_custom_call.1} parent=5 // pred_check_branch
        %815 = sbr.rel (%p813) target = $region40
      $region39: #{tpu_custom_call.1} parent=5 // pred_region
        %s816 = ssub.s32 %s12, 2
        // Predicated region
        $region41: #{tpu_custom_call.1} parent=39 // pred_check
          %p817 = pneg %p109
        $region42: #{tpu_custom_call.1} parent=39 // pred_check_branch
          %819 = sbr.rel (%p817) target = $region44
        $region43: #{tpu_custom_call.1} parent=39 // pred_region
          %s820 = sand.u32 %s94, 1
          %s821 = scalar_lea.sflag [#allocation4], %s820
          %s822 = sand.u32 %s94, 1
          %s823 = smul.addr %s822, 16
          %s824 = scalar_lea.vmem [#allocation3], %s823
          %825 = dma.done %s821, 256
        $region44: #{tpu_custom_call.1} parent=39 // pred_fallthru
          _
      $region40: #{tpu_custom_call.1} parent=5 // pred_fallthru
        _
    $region6: #{tpu_custom_call.1} parent=1 // loop_footer
      %s16 = sadd.s32 1, %s12
    $region7: #{tpu_custom_call.1} parent=1 // loop_footer_branch
      %11 = sbr.rel target = $region3
    $region8: #{tpu_custom_call.1} parent=1 // loop_exit
      _
    %826 = vsyncpa [#allocation4], 1
    %s827 = scalar_lea.sflag [#allocation4], 1
    %828 = vsyncpa %s827, 1

</llo_original>
